<compile_context>
chip_gen: v7x
topology: tpu7x:2x2x1
jax: 0.10.0
libtpu: 0.0.40
codegen_flags: <defaults>
</compile_context>

<pallas_src>
import functools

import jax
import jax.numpy as jnp
import numpy as np
from jax import lax
from jax.experimental import pallas as pl
from jax.experimental.pallas import tpu as pltpu

# ---- model hyper-parameters (from largeFilterCNN.__init__) ------------------
C = 64             # out_channels of every conv layer
K0, S0 = 400, 50   # conv_layer0: kernel_size=400, stride=50, in_channels=1
NC0 = K0 // S0     # 8 stride-sized chunks per conv0 window (400 % 50 == 0)
CW = 64            # chunk width after zero-padding 50 -> 64 (lane friendly)
POOL0 = 8          # maxpool_layer0: kernel=8, stride=8
KS = 6             # conv_layer1..4: kernel_size=6, stride=1, padding='same'
PAD_L, PAD_R = 2, 3    # PyTorch 'same' padding split for even kernel 6
POOL1 = 4          # maxpool_layer1: kernel=4, stride=4
BN_EPS = 1e-5


# ---- the fused Pallas kernel -------------------------------------------------
def _fused_kernel(Bb, L0, L1, L2,
                  x_ref, w0_ref, aff_ref, wcat_ref, out_ref, pad_ref):
    # conv0 (k=400, s=50): rebuild the patch matrix from 8 shifted chunk views
    # as two K=256 slabs and accumulate two bf16 MXU matmuls (f32 acc), so the
    # slice/concat copies of slab 2 overlap the matmul of slab 1.
    half = (NC0 // 2) * CW                                         # 256
    p_lo = jnp.concatenate(
        [x_ref[:, k:k + L0, :] for k in range(NC0 // 2)],
        axis=-1).reshape(Bb * L0, half)
    p_hi = jnp.concatenate(
        [x_ref[:, k:k + L0, :] for k in range(NC0 // 2, NC0)],
        axis=-1).reshape(Bb * L0, half)
    z = (jnp.dot(p_lo, w0_ref[:half, :], preferred_element_type=jnp.float32)
         + jnp.dot(p_hi, w0_ref[half:, :], preferred_element_type=jnp.float32))
    z = jnp.maximum(z * aff_ref[0:1, :] + aff_ref[1:2, :], 0.0)    # BN0 + ReLU

    # maxpool_layer0 (k=8, s=8) over time; dropout is identity in eval mode.
    h = z.reshape(Bb, L1, POOL0, C).max(axis=2)                    # (Bb, L1, C)

    # 'same'-conv time buffer: a single full (unmasked) store of the zero-padded
    # activation — no separate pad-row / interior partial stores.
    zl = jnp.zeros((Bb, PAD_L, C), pad_ref.dtype)
    zr = jnp.zeros((Bb, PAD_R, C), pad_ref.dtype)
    pad_ref[...] = jnp.concatenate([zl, h.astype(pad_ref.dtype), zr], axis=1)

    # conv1..4: each k=6 'same' conv is ONE K=384 matmul against the
    # tap-concatenated input, + folded BN + ReLU.
    hl = None
    for l in range(4):
        xcat = jnp.concatenate(
            [pad_ref[:, k:k + L1, :] for k in range(KS)], axis=-1)  # (Bb,L1,384)
        acc = jnp.dot(xcat.reshape(Bb * L1, KS * C), wcat_ref[l],
                      preferred_element_type=jnp.float32)           # (Bb*L1, C)
        s = aff_ref[2 * l + 2:2 * l + 3, :]
        t = aff_ref[2 * l + 3:2 * l + 4, :]
        hl = jnp.maximum(acc * s + t, 0.0)
        if l < 3:   # last layer is pooled directly from the f32 result
            pad_ref[...] = jnp.concatenate(
                [zl, hl.reshape(Bb, L1, C).astype(pad_ref.dtype), zr], axis=1)

    # maxpool_layer1 (k=4, s=4) over time, channels-last output block.
    out_ref[...] = hl.reshape(Bb, L2, POOL1, C).max(axis=2)         # (Bb, L2, C)


def _pick_grid(B, L0):
    """Choose (batch block Bb, grid size G); the wrapper pads B up to G*Bb."""
    # Target ~4096 conv0 rows per grid step (=> Bb*L1 ~ 512 rows for conv1..4),
    # which keeps the MXU M dimension fed while the per-step live set stays
    # ~10-12 MiB — comfortably inside every generation's VMEM budget.
    bb = max(1, min(B, 4096 // max(L0, 1)))
    g = -(-B // bb)
    if B > 1:
        # >=2 steps so input DMA overlaps compute; >=4 even steps when the
        # batch is big enough so v7x's two TensorCores each pipeline >=2 steps.
        g_min = 4 if (B * L0) // 4 >= 1024 else 2
        g = max(g, g_min)
        if g > 2 and g % 2:
            g += 1
    bb = -(-B // g)
    g = -(-B // bb)
    return bb, g


# ---- wrapper -----------------------------------------------------------------
def large_filter_cnn_forward(x, params):
    """x: (B, 1, L) float32, same NCL convention as the PyTorch module."""
    B, cin, L = x.shape
    assert cin == 1 and L >= K0
    L0 = (L - K0) // S0 + 1
    assert L0 % (POOL0 * POOL1) == 0, "pick L so conv0 output divides both pools"
    L1 = L0 // POOL0
    L2 = L1 // POOL1

    Bb, G = _pick_grid(B, L0)
    Bp = Bb * G                                    # padded batch

    # Raw input as 50-sample chunks, zero-padded to 64 lanes, bf16; batch padded
    # up to G*Bb (pad rows compute garbage that is sliced away below).
    Lu = K0 + S0 * (L0 - 1)                        # samples conv0 actually reads
    xc = x[:, 0, :Lu].reshape(B, L0 + NC0 - 1, S0)
    xc = jnp.pad(xc, ((0, Bp - B), (0, 0), (0, CW - S0))).astype(jnp.bfloat16)

    # conv0 weight (out, 1, 400) -> (NC0*CW, C), rows match the in-kernel
    # chunk-concat ordering (tap-major, zero rows for the 50->64 pad).
    w0 = jnp.pad(params["w0"].reshape(C, NC0, S0), ((0, 0), (0, 0), (0, CW - S0)))
    w0t = jnp.transpose(w0, (1, 2, 0)).reshape(NC0 * CW, C).astype(jnp.bfloat16)

    # conv1..4 weights (out, in, k) -> (4, KS*C, C), tap-major rows for K=384.
    wcat = jnp.stack(
        [jnp.transpose(params[f"w{l}"], (2, 1, 0)).reshape(KS * C, C)
         for l in range(1, 5)], axis=0).astype(jnp.bfloat16)

    # Fold conv bias + eval-mode BatchNorm into per-channel scale/shift (f32).
    affs = []
    for l in range(5):
        scale = params[f"bn{l}_gamma"] / jnp.sqrt(params[f"bn{l}_var"] + BN_EPS)
        shift = (params[f"b{l}"] - params[f"bn{l}_mean"]) * scale \
            + params[f"bn{l}_beta"]
        affs += [scale, shift]
    aff = jnp.stack(affs, axis=0).astype(jnp.float32)               # (10, C)

    kernel = functools.partial(_fused_kernel, Bb, L0, L1, L2)
    out = pl.pallas_call(
        kernel,
        out_shape=jax.ShapeDtypeStruct((Bp, L2, C), jnp.float32),
        grid_spec=pltpu.PrefetchScalarGridSpec(
            num_scalar_prefetch=0,
            grid=(G,),
            in_specs=[
                pl.BlockSpec((Bb, L0 + NC0 - 1, CW), lambda g: (g, 0, 0)),
                pl.BlockSpec((NC0 * CW, C), lambda g: (0, 0)),
                pl.BlockSpec((10, C), lambda g: (0, 0)),
                pl.BlockSpec((4, KS * C, C), lambda g: (0, 0, 0)),
            ],
            out_specs=pl.BlockSpec((Bb, L2, C), lambda g: (g, 0, 0)),
            scratch_shapes=[pltpu.VMEM((Bb, L1 + KS - 1, C), jnp.bfloat16)],
        ),
        compiler_params=pltpu.CompilerParams(
            dimension_semantics=("parallel",),
            vmem_limit_bytes=48 * 1024 * 1024),
    )(xc, w0t, aff, wcat)

    # Drop batch padding, back to PyTorch ordering: (B, C, L2) -> view(B, C*L2).
    y = out[:B].transpose(0, 2, 1).reshape(B, C * L2)
    return y


# ---- pure-JAX reference (for correctness check) -------------------------------
def _conv1d_ref(y, w, b, stride, padding):
    out = lax.conv_general_dilated(
        y, w, window_strides=(stride,), padding=padding,
        dimension_numbers=("NCH", "OIH", "NCH"))
    return out + b[None, :, None]


def reference_forward(x, params):
    def bn(y, l):
        g = params[f"bn{l}_gamma"][None, :, None]
        b = params[f"bn{l}_beta"][None, :, None]
        m = params[f"bn{l}_mean"][None, :, None]
        v = params[f"bn{l}_var"][None, :, None]
        return (y - m) / jnp.sqrt(v + BN_EPS) * g + b

    y = _conv1d_ref(x, params["w0"], params["b0"], S0, "VALID")
    y = jnp.maximum(bn(y, 0), 0.0)
    B, _, L0 = y.shape
    y = y.reshape(B, C, L0 // POOL0, POOL0).max(axis=-1)
    for l in range(1, 5):
        y = _conv1d_ref(y, params[f"w{l}"], params[f"b{l}"], 1, [(PAD_L, PAD_R)])
        y = jnp.maximum(bn(y, l), 0.0)
    B, _, L1 = y.shape
    y = y.reshape(B, C, L1 // POOL1, POOL1).max(axis=-1)
    return y.reshape(B, -1)


# ---- deterministic parameter initialization -----------------------------------
def init_params(key):
    params = {}
    keys = iter(jax.random.split(key, 32))
    params["w0"] = jax.random.normal(next(keys), (C, 1, K0), jnp.float32) * 0.05
    params["b0"] = jax.random.normal(next(keys), (C,), jnp.float32) * 0.05
    for l in range(1, 5):
        params[f"w{l}"] = jax.random.normal(next(keys), (C, C, KS),
                                            jnp.float32) * 0.05
        params[f"b{l}"] = jax.random.normal(next(keys), (C,), jnp.float32) * 0.05
    for l in range(5):
        params[f"bn{l}_gamma"] = 1.0 + 0.1 * jax.random.normal(next(keys), (C,),
                                                               jnp.float32)
        params[f"bn{l}_beta"] = 0.1 * jax.random.normal(next(keys), (C,),
                                                        jnp.float32)
        params[f"bn{l}_mean"] = 0.1 * jax.random.normal(next(keys), (C,),
                                                        jnp.float32)
        params[f"bn{l}_var"] = 1.0 + 0.1 * jax.random.uniform(next(keys), (C,),
                                                              jnp.float32)
    return params


if __name__ == "__main__":
    B = 2
    L0 = 64                       # conv0 output length
    L = K0 + S0 * (L0 - 1)        # 3550 input samples (kernel 400 forces >= 400)

    key = jax.random.PRNGKey(0)
    kx, kp = jax.random.split(key)
    x = jax.random.normal(kx, (B, 1, L), jnp.float32)
    params = init_params(kp)

    y = jax.block_until_ready(large_filter_cnn_forward(x, params))
    assert y.shape == (B, C * (L0 // POOL0 // POOL1)), y.shape  # (2, 128)

    y_ref = jax.block_until_ready(reference_forward(x, params))
    # Tolerance sized for the bf16 MXU-operand path (f32 accumulation).
    np.testing.assert_allclose(np.asarray(y), np.asarray(y_ref),
                               rtol=5e-2, atol=5e-2)
    print("KERNEL_OK")
</pallas_src>

<mosaic_0001>
module attributes {stable_mosaic.version = 11 : i64} {
  func.func @_fused_kernel(%arg0: i32, %arg1: memref<1x71x64xbf16, #tpu.memory_space<vmem>>, %arg2: memref<512x64xbf16, #tpu.memory_space<vmem>>, %arg3: memref<10x64xf32, #tpu.memory_space<vmem>>, %arg4: memref<4x384x64xbf16, #tpu.memory_space<vmem>>, %arg5: memref<1x2x64xf32, #tpu.memory_space<vmem>>, %arg6: memref<1x13x64xbf16, #tpu.memory_space<vmem>>) attributes {dimension_semantics = [#tpu.dimension_semantics<parallel>], iteration_bounds = array<i64: 2>, scalar_prefetch = 0 : i64, scratch_operands = 1 : i64, tpu.core_type = #tpu.core_type<tc>, window_params = [{transform_indices = @transform_0, window_bounds = array<i64: 1, 71, 64>}, {pipeline_mode = #tpu.pipeline_mode<synchronous>, transform_indices = @transform_1, window_bounds = array<i64: 512, 64>}, {pipeline_mode = #tpu.pipeline_mode<synchronous>, transform_indices = @transform_2, window_bounds = array<i64: 10, 64>}, {pipeline_mode = #tpu.pipeline_mode<synchronous>, transform_indices = @transform_3, window_bounds = array<i64: 4, 384, 64>}, {transform_indices = @transform_4, window_bounds = array<i64: 1, 2, 64>}]} {
    %c0 = arith.constant 0 : index
    %c0_0 = arith.constant 0 : index
    %c0_1 = arith.constant 0 : index
    %0 = vector.load %arg1[%c0, %c0_0, %c0_1] : memref<1x71x64xbf16, #tpu.memory_space<vmem>>, vector<1x64x64xbf16>
    %c0_2 = arith.constant 0 : index
    %c1 = arith.constant 1 : index
    %c0_3 = arith.constant 0 : index
    %1 = vector.load %arg1[%c0_2, %c1, %c0_3] : memref<1x71x64xbf16, #tpu.memory_space<vmem>>, vector<1x64x64xbf16>
    %c0_4 = arith.constant 0 : index
    %c2 = arith.constant 2 : index
    %c0_5 = arith.constant 0 : index
    %2 = vector.load %arg1[%c0_4, %c2, %c0_5] : memref<1x71x64xbf16, #tpu.memory_space<vmem>>, vector<1x64x64xbf16>
    %c0_6 = arith.constant 0 : index
    %c3 = arith.constant 3 : index
    %c0_7 = arith.constant 0 : index
    %3 = vector.load %arg1[%c0_6, %c3, %c0_7] : memref<1x71x64xbf16, #tpu.memory_space<vmem>>, vector<1x64x64xbf16>
    %4 = tpu.concatenate %0, %1, %2, %3 in 2 : vector<1x64x64xbf16>, vector<1x64x64xbf16>, vector<1x64x64xbf16>, vector<1x64x64xbf16> -> vector<1x64x256xbf16>
    %5 = vector.shape_cast %4 : vector<1x64x256xbf16> to vector<64x256xbf16>
    %c0_8 = arith.constant 0 : index
    %c4 = arith.constant 4 : index
    %c0_9 = arith.constant 0 : index
    %6 = vector.load %arg1[%c0_8, %c4, %c0_9] : memref<1x71x64xbf16, #tpu.memory_space<vmem>>, vector<1x64x64xbf16>
    %c0_10 = arith.constant 0 : index
    %c5 = arith.constant 5 : index
    %c0_11 = arith.constant 0 : index
    %7 = vector.load %arg1[%c0_10, %c5, %c0_11] : memref<1x71x64xbf16, #tpu.memory_space<vmem>>, vector<1x64x64xbf16>
    %c0_12 = arith.constant 0 : index
    %c6 = arith.constant 6 : index
    %c0_13 = arith.constant 0 : index
    %8 = vector.load %arg1[%c0_12, %c6, %c0_13] : memref<1x71x64xbf16, #tpu.memory_space<vmem>>, vector<1x64x64xbf16>
    %c0_14 = arith.constant 0 : index
    %c7 = arith.constant 7 : index
    %c0_15 = arith.constant 0 : index
    %9 = vector.load %arg1[%c0_14, %c7, %c0_15] : memref<1x71x64xbf16, #tpu.memory_space<vmem>>, vector<1x64x64xbf16>
    %10 = tpu.concatenate %6, %7, %8, %9 in 2 : vector<1x64x64xbf16>, vector<1x64x64xbf16>, vector<1x64x64xbf16>, vector<1x64x64xbf16> -> vector<1x64x256xbf16>
    %11 = vector.shape_cast %10 : vector<1x64x256xbf16> to vector<64x256xbf16>
    %c0_16 = arith.constant 0 : index
    %c0_17 = arith.constant 0 : index
    %12 = vector.load %arg2[%c0_16, %c0_17] : memref<512x64xbf16, #tpu.memory_space<vmem>>, vector<256x64xbf16>
    %cst = arith.constant dense<0.000000e+00> : vector<64x64xf32>
    %13 = tpu.matmul %5, %12, %cst {dimension_numbers = #tpu.dot_dimension_numbers<[1], [0], [0], [1], [0, 0, 1, 1], [], []>} : vector<64x256xbf16>, vector<256x64xbf16>, vector<64x64xf32> -> vector<64x64xf32>
    %c256 = arith.constant 256 : index
    %c0_18 = arith.constant 0 : index
    %14 = vector.load %arg2[%c256, %c0_18] : memref<512x64xbf16, #tpu.memory_space<vmem>>, vector<256x64xbf16>
    %cst_19 = arith.constant dense<0.000000e+00> : vector<64x64xf32>
    %15 = tpu.matmul %11, %14, %cst_19 {dimension_numbers = #tpu.dot_dimension_numbers<[1], [0], [0], [1], [0, 0, 1, 1], [], []>} : vector<64x256xbf16>, vector<256x64xbf16>, vector<64x64xf32> -> vector<64x64xf32>
    %16 = arith.addf %13, %15 : vector<64x64xf32>
    %c0_20 = arith.constant 0 : index
    %c0_21 = arith.constant 0 : index
    %17 = vector.load %arg3[%c0_20, %c0_21] : memref<10x64xf32, #tpu.memory_space<vmem>>, vector<1x64xf32>
    %18 = vector.broadcast %17 : vector<1x64xf32> to vector<64x64xf32>
    %19 = arith.mulf %16, %18 : vector<64x64xf32>
    %c1_22 = arith.constant 1 : index
    %c0_23 = arith.constant 0 : index
    %20 = vector.load %arg3[%c1_22, %c0_23] : memref<10x64xf32, #tpu.memory_space<vmem>>, vector<1x64xf32>
    %21 = vector.broadcast %20 : vector<1x64xf32> to vector<64x64xf32>
    %22 = arith.addf %19, %21 : vector<64x64xf32>
    %cst_24 = arith.constant 0.000000e+00 : f32
    %23 = vector.broadcast %cst_24 : f32 to vector<64x64xf32>
    %24 = arith.maximumf %22, %23 : vector<64x64xf32>
    %25 = vector.shape_cast %24 : vector<64x64xf32> to vector<1x8x8x64xf32>
    %cst_25 = arith.constant dense<0xFF800000> : vector<1x8x64xf32>
    %26 = vector.multi_reduction <maximumf>, %25, %cst_25 [2] : vector<1x8x8x64xf32> to vector<1x8x64xf32>
    %cst_26 = arith.constant 0.000000e+00 : bf16
    %27 = vector.broadcast %cst_26 : bf16 to vector<1x2x64xbf16>
    %cst_27 = arith.constant 0.000000e+00 : bf16
    %28 = vector.broadcast %cst_27 : bf16 to vector<1x3x64xbf16>
    %29 = arith.truncf %26 : vector<1x8x64xf32> to vector<1x8x64xbf16>
    %30 = tpu.concatenate %27, %29, %28 in 1 : vector<1x2x64xbf16>, vector<1x8x64xbf16>, vector<1x3x64xbf16> -> vector<1x13x64xbf16>
    %c0_28 = arith.constant 0 : index
    %c0_29 = arith.constant 0 : index
    %c0_30 = arith.constant 0 : index
    %31 = vector.load %arg6[%c0_28, %c0_29, %c0_30] : memref<1x13x64xbf16, #tpu.memory_space<vmem>>, vector<1x13x64xbf16>
    tpu.vector_store %arg6[%c0_28, %c0_29, %c0_30], %30 {strides = array<i32>} : memref<1x13x64xbf16, #tpu.memory_space<vmem>>, vector<1x13x64xbf16>,
    %c0_31 = arith.constant 0 : index
    %c0_32 = arith.constant 0 : index
    %c0_33 = arith.constant 0 : index
    %32 = vector.load %arg6[%c0_31, %c0_32, %c0_33] : memref<1x13x64xbf16, #tpu.memory_space<vmem>>, vector<1x8x64xbf16>
    %c0_34 = arith.constant 0 : index
    %c1_35 = arith.constant 1 : index
    %c0_36 = arith.constant 0 : index
    %33 = vector.load %arg6[%c0_34, %c1_35, %c0_36] : memref<1x13x64xbf16, #tpu.memory_space<vmem>>, vector<1x8x64xbf16>
    %c0_37 = arith.constant 0 : index
    %c2_38 = arith.constant 2 : index
    %c0_39 = arith.constant 0 : index
    %34 = vector.load %arg6[%c0_37, %c2_38, %c0_39] : memref<1x13x64xbf16, #tpu.memory_space<vmem>>, vector<1x8x64xbf16>
    %c0_40 = arith.constant 0 : index
    %c3_41 = arith.constant 3 : index
    %c0_42 = arith.constant 0 : index
    %35 = vector.load %arg6[%c0_40, %c3_41, %c0_42] : memref<1x13x64xbf16, #tpu.memory_space<vmem>>, vector<1x8x64xbf16>
    %c0_43 = arith.constant 0 : index
    %c4_44 = arith.constant 4 : index
    %c0_45 = arith.constant 0 : index
    %36 = vector.load %arg6[%c0_43, %c4_44, %c0_45] : memref<1x13x64xbf16, #tpu.memory_space<vmem>>, vector<1x8x64xbf16>
    %c0_46 = arith.constant 0 : index
    %c5_47 = arith.constant 5 : index
    %c0_48 = arith.constant 0 : index
    %37 = vector.load %arg6[%c0_46, %c5_47, %c0_48] : memref<1x13x64xbf16, #tpu.memory_space<vmem>>, vector<1x8x64xbf16>
    %38 = tpu.concatenate %32, %33, %34, %35, %36, %37 in 2 : vector<1x8x64xbf16>, vector<1x8x64xbf16>, vector<1x8x64xbf16>, vector<1x8x64xbf16>, vector<1x8x64xbf16>, vector<1x8x64xbf16> -> vector<1x8x384xbf16>
    %39 = vector.shape_cast %38 : vector<1x8x384xbf16> to vector<8x384xbf16>
    %c0_49 = arith.constant 0 : index
    %c0_50 = arith.constant 0 : index
    %c0_51 = arith.constant 0 : index
    %40 = vector.load %arg4[%c0_49, %c0_50, %c0_51] : memref<4x384x64xbf16, #tpu.memory_space<vmem>>, vector<1x384x64xbf16>
    %41 = vector.shape_cast %40 : vector<1x384x64xbf16> to vector<384x64xbf16>
    %cst_52 = arith.constant dense<0.000000e+00> : vector<8x64xf32>
    %42 = tpu.matmul %39, %41, %cst_52 {dimension_numbers = #tpu.dot_dimension_numbers<[1], [0], [0], [1], [0, 0, 1, 1], [], []>} : vector<8x384xbf16>, vector<384x64xbf16>, vector<8x64xf32> -> vector<8x64xf32>
    %c2_53 = arith.constant 2 : index
    %c0_54 = arith.constant 0 : index
    %43 = vector.load %arg3[%c2_53, %c0_54] : memref<10x64xf32, #tpu.memory_space<vmem>>, vector<1x64xf32>
    %c3_55 = arith.constant 3 : index
    %c0_56 = arith.constant 0 : index
    %44 = vector.load %arg3[%c3_55, %c0_56] : memref<10x64xf32, #tpu.memory_space<vmem>>, vector<1x64xf32>
    %45 = vector.broadcast %43 : vector<1x64xf32> to vector<8x64xf32>
    %46 = arith.mulf %42, %45 : vector<8x64xf32>
    %47 = vector.broadcast %44 : vector<1x64xf32> to vector<8x64xf32>
    %48 = arith.addf %46, %47 : vector<8x64xf32>
    %cst_57 = arith.constant 0.000000e+00 : f32
    %49 = vector.broadcast %cst_57 : f32 to vector<8x64xf32>
    %50 = arith.maximumf %48, %49 : vector<8x64xf32>
    %51 = vector.shape_cast %50 : vector<8x64xf32> to vector<1x8x64xf32>
    %52 = arith.truncf %51 : vector<1x8x64xf32> to vector<1x8x64xbf16>
    %53 = tpu.concatenate %27, %52, %28 in 1 : vector<1x2x64xbf16>, vector<1x8x64xbf16>, vector<1x3x64xbf16> -> vector<1x13x64xbf16>
    %c0_58 = arith.constant 0 : index
    %c0_59 = arith.constant 0 : index
    %c0_60 = arith.constant 0 : index
    %54 = vector.load %arg6[%c0_58, %c0_59, %c0_60] : memref<1x13x64xbf16, #tpu.memory_space<vmem>>, vector<1x13x64xbf16>
    tpu.vector_store %arg6[%c0_58, %c0_59, %c0_60], %53 {strides = array<i32>} : memref<1x13x64xbf16, #tpu.memory_space<vmem>>, vector<1x13x64xbf16>,
    %c0_61 = arith.constant 0 : index
    %c0_62 = arith.constant 0 : index
    %c0_63 = arith.constant 0 : index
    %55 = vector.load %arg6[%c0_61, %c0_62, %c0_63] : memref<1x13x64xbf16, #tpu.memory_space<vmem>>, vector<1x8x64xbf16>
    %c0_64 = arith.constant 0 : index
    %c1_65 = arith.constant 1 : index
    %c0_66 = arith.constant 0 : index
    %56 = vector.load %arg6[%c0_64, %c1_65, %c0_66] : memref<1x13x64xbf16, #tpu.memory_space<vmem>>, vector<1x8x64xbf16>
    %c0_67 = arith.constant 0 : index
    %c2_68 = arith.constant 2 : index
    %c0_69 = arith.constant 0 : index
    %57 = vector.load %arg6[%c0_67, %c2_68, %c0_69] : memref<1x13x64xbf16, #tpu.memory_space<vmem>>, vector<1x8x64xbf16>
    %c0_70 = arith.constant 0 : index
    %c3_71 = arith.constant 3 : index
    %c0_72 = arith.constant 0 : index
    %58 = vector.load %arg6[%c0_70, %c3_71, %c0_72] : memref<1x13x64xbf16, #tpu.memory_space<vmem>>, vector<1x8x64xbf16>
    %c0_73 = arith.constant 0 : index
    %c4_74 = arith.constant 4 : index
    %c0_75 = arith.constant 0 : index
    %59 = vector.load %arg6[%c0_73, %c4_74, %c0_75] : memref<1x13x64xbf16, #tpu.memory_space<vmem>>, vector<1x8x64xbf16>
    %c0_76 = arith.constant 0 : index
    %c5_77 = arith.constant 5 : index
    %c0_78 = arith.constant 0 : index
    %60 = vector.load %arg6[%c0_76, %c5_77, %c0_78] : memref<1x13x64xbf16, #tpu.memory_space<vmem>>, vector<1x8x64xbf16>
    %61 = tpu.concatenate %55, %56, %57, %58, %59, %60 in 2 : vector<1x8x64xbf16>, vector<1x8x64xbf16>, vector<1x8x64xbf16>, vector<1x8x64xbf16>, vector<1x8x64xbf16>, vector<1x8x64xbf16> -> vector<1x8x384xbf16>
    %62 = vector.shape_cast %61 : vector<1x8x384xbf16> to vector<8x384xbf16>
    %c1_79 = arith.constant 1 : index
    %c0_80 = arith.constant 0 : index
    %c0_81 = arith.constant 0 : index
    %63 = vector.load %arg4[%c1_79, %c0_80, %c0_81] : memref<4x384x64xbf16, #tpu.memory_space<vmem>>, vector<1x384x64xbf16>
    %64 = vector.shape_cast %63 : vector<1x384x64xbf16> to vector<384x64xbf16>
    %cst_82 = arith.constant dense<0.000000e+00> : vector<8x64xf32>
    %65 = tpu.matmul %62, %64, %cst_82 {dimension_numbers = #tpu.dot_dimension_numbers<[1], [0], [0], [1], [0, 0, 1, 1], [], []>} : vector<8x384xbf16>, vector<384x64xbf16>, vector<8x64xf32> -> vector<8x64xf32>
    %c4_83 = arith.constant 4 : index
    %c0_84 = arith.constant 0 : index
    %66 = vector.load %arg3[%c4_83, %c0_84] : memref<10x64xf32, #tpu.memory_space<vmem>>, vector<1x64xf32>
    %c5_85 = arith.constant 5 : index
    %c0_86 = arith.constant 0 : index
    %67 = vector.load %arg3[%c5_85, %c0_86] : memref<10x64xf32, #tpu.memory_space<vmem>>, vector<1x64xf32>
    %68 = vector.broadcast %66 : vector<1x64xf32> to vector<8x64xf32>
    %69 = arith.mulf %65, %68 : vector<8x64xf32>
    %70 = vector.broadcast %67 : vector<1x64xf32> to vector<8x64xf32>
    %71 = arith.addf %69, %70 : vector<8x64xf32>
    %cst_87 = arith.constant 0.000000e+00 : f32
    %72 = vector.broadcast %cst_87 : f32 to vector<8x64xf32>
    %73 = arith.maximumf %71, %72 : vector<8x64xf32>
    %74 = vector.shape_cast %73 : vector<8x64xf32> to vector<1x8x64xf32>
    %75 = arith.truncf %74 : vector<1x8x64xf32> to vector<1x8x64xbf16>
    %76 = tpu.concatenate %27, %75, %28 in 1 : vector<1x2x64xbf16>, vector<1x8x64xbf16>, vector<1x3x64xbf16> -> vector<1x13x64xbf16>
    %c0_88 = arith.constant 0 : index
    %c0_89 = arith.constant 0 : index
    %c0_90 = arith.constant 0 : index
    %77 = vector.load %arg6[%c0_88, %c0_89, %c0_90] : memref<1x13x64xbf16, #tpu.memory_space<vmem>>, vector<1x13x64xbf16>
    tpu.vector_store %arg6[%c0_88, %c0_89, %c0_90], %76 {strides = array<i32>} : memref<1x13x64xbf16, #tpu.memory_space<vmem>>, vector<1x13x64xbf16>,
    %c0_91 = arith.constant 0 : index
    %c0_92 = arith.constant 0 : index
    %c0_93 = arith.constant 0 : index
    %78 = vector.load %arg6[%c0_91, %c0_92, %c0_93] : memref<1x13x64xbf16, #tpu.memory_space<vmem>>, vector<1x8x64xbf16>
    %c0_94 = arith.constant 0 : index
    %c1_95 = arith.constant 1 : index
    %c0_96 = arith.constant 0 : index
    %79 = vector.load %arg6[%c0_94, %c1_95, %c0_96] : memref<1x13x64xbf16, #tpu.memory_space<vmem>>, vector<1x8x64xbf16>
    %c0_97 = arith.constant 0 : index
    %c2_98 = arith.constant 2 : index
    %c0_99 = arith.constant 0 : index
    %80 = vector.load %arg6[%c0_97, %c2_98, %c0_99] : memref<1x13x64xbf16, #tpu.memory_space<vmem>>, vector<1x8x64xbf16>
    %c0_100 = arith.constant 0 : index
    %c3_101 = arith.constant 3 : index
    %c0_102 = arith.constant 0 : index
    %81 = vector.load %arg6[%c0_100, %c3_101, %c0_102] : memref<1x13x64xbf16, #tpu.memory_space<vmem>>, vector<1x8x64xbf16>
    %c0_103 = arith.constant 0 : index
    %c4_104 = arith.constant 4 : index
    %c0_105 = arith.constant 0 : index
    %82 = vector.load %arg6[%c0_103, %c4_104, %c0_105] : memref<1x13x64xbf16, #tpu.memory_space<vmem>>, vector<1x8x64xbf16>
    %c0_106 = arith.constant 0 : index
    %c5_107 = arith.constant 5 : index
    %c0_108 = arith.constant 0 : index
    %83 = vector.load %arg6[%c0_106, %c5_107, %c0_108] : memref<1x13x64xbf16, #tpu.memory_space<vmem>>, vector<1x8x64xbf16>
    %84 = tpu.concatenate %78, %79, %80, %81, %82, %83 in 2 : vector<1x8x64xbf16>, vector<1x8x64xbf16>, vector<1x8x64xbf16>, vector<1x8x64xbf16>, vector<1x8x64xbf16>, vector<1x8x64xbf16> -> vector<1x8x384xbf16>
    %85 = vector.shape_cast %84 : vector<1x8x384xbf16> to vector<8x384xbf16>
    %c2_109 = arith.constant 2 : index
    %c0_110 = arith.constant 0 : index
    %c0_111 = arith.constant 0 : index
    %86 = vector.load %arg4[%c2_109, %c0_110, %c0_111] : memref<4x384x64xbf16, #tpu.memory_space<vmem>>, vector<1x384x64xbf16>
    %87 = vector.shape_cast %86 : vector<1x384x64xbf16> to vector<384x64xbf16>
    %cst_112 = arith.constant dense<0.000000e+00> : vector<8x64xf32>
    %88 = tpu.matmul %85, %87, %cst_112 {dimension_numbers = #tpu.dot_dimension_numbers<[1], [0], [0], [1], [0, 0, 1, 1], [], []>} : vector<8x384xbf16>, vector<384x64xbf16>, vector<8x64xf32> -> vector<8x64xf32>
    %c6_113 = arith.constant 6 : index
    %c0_114 = arith.constant 0 : index
    %89 = vector.load %arg3[%c6_113, %c0_114] : memref<10x64xf32, #tpu.memory_space<vmem>>, vector<1x64xf32>
    %c7_115 = arith.constant 7 : index
    %c0_116 = arith.constant 0 : index
    %90 = vector.load %arg3[%c7_115, %c0_116] : memref<10x64xf32, #tpu.memory_space<vmem>>, vector<1x64xf32>
    %91 = vector.broadcast %89 : vector<1x64xf32> to vector<8x64xf32>
    %92 = arith.mulf %88, %91 : vector<8x64xf32>
    %93 = vector.broadcast %90 : vector<1x64xf32> to vector<8x64xf32>
    %94 = arith.addf %92, %93 : vector<8x64xf32>
    %cst_117 = arith.constant 0.000000e+00 : f32
    %95 = vector.broadcast %cst_117 : f32 to vector<8x64xf32>
    %96 = arith.maximumf %94, %95 : vector<8x64xf32>
    %97 = vector.shape_cast %96 : vector<8x64xf32> to vector<1x8x64xf32>
    %98 = arith.truncf %97 : vector<1x8x64xf32> to vector<1x8x64xbf16>
    %99 = tpu.concatenate %27, %98, %28 in 1 : vector<1x2x64xbf16>, vector<1x8x64xbf16>, vector<1x3x64xbf16> -> vector<1x13x64xbf16>
    %c0_118 = arith.constant 0 : index
    %c0_119 = arith.constant 0 : index
    %c0_120 = arith.constant 0 : index
    %100 = vector.load %arg6[%c0_118, %c0_119, %c0_120] : memref<1x13x64xbf16, #tpu.memory_space<vmem>>, vector<1x13x64xbf16>
    tpu.vector_store %arg6[%c0_118, %c0_119, %c0_120], %99 {strides = array<i32>} : memref<1x13x64xbf16, #tpu.memory_space<vmem>>, vector<1x13x64xbf16>,
    %c0_121 = arith.constant 0 : index
    %c0_122 = arith.constant 0 : index
    %c0_123 = arith.constant 0 : index
    %101 = vector.load %arg6[%c0_121, %c0_122, %c0_123] : memref<1x13x64xbf16, #tpu.memory_space<vmem>>, vector<1x8x64xbf16>
    %c0_124 = arith.constant 0 : index
    %c1_125 = arith.constant 1 : index
    %c0_126 = arith.constant 0 : index
    %102 = vector.load %arg6[%c0_124, %c1_125, %c0_126] : memref<1x13x64xbf16, #tpu.memory_space<vmem>>, vector<1x8x64xbf16>
    %c0_127 = arith.constant 0 : index
    %c2_128 = arith.constant 2 : index
    %c0_129 = arith.constant 0 : index
    %103 = vector.load %arg6[%c0_127, %c2_128, %c0_129] : memref<1x13x64xbf16, #tpu.memory_space<vmem>>, vector<1x8x64xbf16>
    %c0_130 = arith.constant 0 : index
    %c3_131 = arith.constant 3 : index
    %c0_132 = arith.constant 0 : index
    %104 = vector.load %arg6[%c0_130, %c3_131, %c0_132] : memref<1x13x64xbf16, #tpu.memory_space<vmem>>, vector<1x8x64xbf16>
    %c0_133 = arith.constant 0 : index
    %c4_134 = arith.constant 4 : index
    %c0_135 = arith.constant 0 : index
    %105 = vector.load %arg6[%c0_133, %c4_134, %c0_135] : memref<1x13x64xbf16, #tpu.memory_space<vmem>>, vector<1x8x64xbf16>
    %c0_136 = arith.constant 0 : index
    %c5_137 = arith.constant 5 : index
    %c0_138 = arith.constant 0 : index
    %106 = vector.load %arg6[%c0_136, %c5_137, %c0_138] : memref<1x13x64xbf16, #tpu.memory_space<vmem>>, vector<1x8x64xbf16>
    %107 = tpu.concatenate %101, %102, %103, %104, %105, %106 in 2 : vector<1x8x64xbf16>, vector<1x8x64xbf16>, vector<1x8x64xbf16>, vector<1x8x64xbf16>, vector<1x8x64xbf16>, vector<1x8x64xbf16> -> vector<1x8x384xbf16>
    %108 = vector.shape_cast %107 : vector<1x8x384xbf16> to vector<8x384xbf16>
    %c3_139 = arith.constant 3 : index
    %c0_140 = arith.constant 0 : index
    %c0_141 = arith.constant 0 : index
    %109 = vector.load %arg4[%c3_139, %c0_140, %c0_141] : memref<4x384x64xbf16, #tpu.memory_space<vmem>>, vector<1x384x64xbf16>
    %110 = vector.shape_cast %109 : vector<1x384x64xbf16> to vector<384x64xbf16>
    %cst_142 = arith.constant dense<0.000000e+00> : vector<8x64xf32>
    %111 = tpu.matmul %108, %110, %cst_142 {dimension_numbers = #tpu.dot_dimension_numbers<[1], [0], [0], [1], [0, 0, 1, 1], [], []>} : vector<8x384xbf16>, vector<384x64xbf16>, vector<8x64xf32> -> vector<8x64xf32>
    %c8 = arith.constant 8 : index
    %c0_143 = arith.constant 0 : index
    %112 = vector.load %arg3[%c8, %c0_143] : memref<10x64xf32, #tpu.memory_space<vmem>>, vector<1x64xf32>
    %c9 = arith.constant 9 : index
    %c0_144 = arith.constant 0 : index
    %113 = vector.load %arg3[%c9, %c0_144] : memref<10x64xf32, #tpu.memory_space<vmem>>, vector<1x64xf32>
    %114 = vector.broadcast %112 : vector<1x64xf32> to vector<8x64xf32>
    %115 = arith.mulf %111, %114 : vector<8x64xf32>
    %116 = vector.broadcast %113 : vector<1x64xf32> to vector<8x64xf32>
    %117 = arith.addf %115, %116 : vector<8x64xf32>
    %cst_145 = arith.constant 0.000000e+00 : f32
    %118 = vector.broadcast %cst_145 : f32 to vector<8x64xf32>
    %119 = arith.maximumf %117, %118 : vector<8x64xf32>
    %120 = vector.shape_cast %119 : vector<8x64xf32> to vector<1x2x4x64xf32>
    %cst_146 = arith.constant dense<0xFF800000> : vector<1x2x64xf32>
    %121 = vector.multi_reduction <maximumf>, %120, %cst_146 [2] : vector<1x2x4x64xf32> to vector<1x2x64xf32>
    %c0_147 = arith.constant 0 : index
    %c0_148 = arith.constant 0 : index
    %c0_149 = arith.constant 0 : index
    %122 = vector.load %arg5[%c0_147, %c0_148, %c0_149] : memref<1x2x64xf32, #tpu.memory_space<vmem>>, vector<1x2x64xf32>
    tpu.vector_store %arg5[%c0_147, %c0_148, %c0_149], %121 {strides = array<i32>} : memref<1x2x64xf32, #tpu.memory_space<vmem>>, vector<1x2x64xf32>,
    return
  }
  func.func @transform_0(%arg0: i32) -> (i32, i32, i32) {
    %c0_i32 = arith.constant 0 : i32
    %c0_i32_0 = arith.constant 0 : i32
    %c0_i32_1 = arith.constant 0 : i32
    return %arg0, %c0_i32, %c0_i32_0 : i32, i32, i32
  }
  func.func @transform_1(%arg0: i32) -> (i32, i32) {
    %c0_i32 = arith.constant 0 : i32
    %c0_i32_0 = arith.constant 0 : i32
    %c0_i32_1 = arith.constant 0 : i32
    return %c0_i32, %c0_i32_0 : i32, i32
  }
  func.func @transform_2(%arg0: i32) -> (i32, i32) {
    %c0_i32 = arith.constant 0 : i32
    %c0_i32_0 = arith.constant 0 : i32
    %c0_i32_1 = arith.constant 0 : i32
    return %c0_i32, %c0_i32_0 : i32, i32
  }
  func.func @transform_3(%arg0: i32) -> (i32, i32, i32) {
    %c0_i32 = arith.constant 0 : i32
    %c0_i32_0 = arith.constant 0 : i32
    %c0_i32_1 = arith.constant 0 : i32
    %c0_i32_2 = arith.constant 0 : i32
    return %c0_i32, %c0_i32_0, %c0_i32_1 : i32, i32, i32
  }
  func.func @transform_4(%arg0: i32) -> (i32, i32, i32) {
    %c0_i32 = arith.constant 0 : i32
    %c0_i32_0 = arith.constant 0 : i32
    %c0_i32_1 = arith.constant 0 : i32
    return %arg0, %c0_i32, %c0_i32_0 : i32, i32, i32
  }
}

</mosaic_0001>

<llo_original>
// kernel: tpu_custom_call.1
$region0: #{tpu_custom_call.1}
  #allocation0 [shape = 'u32[]', space=smem, size = 0x4, offset = 0x4, fixed_abs, tag = 'smem constant byte address 0x4 - core index']
  #allocation1 [shape = 'u32[144,128]{1,0:T(1,128)}', space=vmem, size = 0x12000, scoped, tag = 'internal scratch']
  #allocation2 [shape = 'bf16[1,13,64]{2,1,0:T(8,128)(2,1)}', space=vmem, size = 0x1000, scoped, tag = 'scratch operand']
  %s0 = inlined_call_operand.vmem [shape: bf16[2,71,64], index: 0, kind: input, shape index: {}]
  %s1 = inlined_call_operand.vmem [shape: bf16[512,64], index: 1, kind: input, shape index: {}]
  %s2 = inlined_call_operand.vmem [shape: f32[10,64], index: 2, kind: input, shape index: {}]
  %s3 = inlined_call_operand.vmem [shape: bf16[4,384,64], index: 3, kind: input, shape index: {}]
  %s4 = inlined_call_operand.hbm [shape: f32[2,2,64], index: 4, kind: output, shape index: {}]
  %s5 = sld [smem:[#allocation0]]
  $region49: #{tpu_custom_call.1} parent=0
    _
  %s7 = ssub.s32 1, %s5
  %s8 = scalar_select 0, %s7, %s5
  $region1: #{tpu_custom_call.1} parent=0
    #allocation3 [shape = 'u8[2048]{0}', space=vmem, size = 0x800, scoped, tag = 'output window, operand 0']
    #allocation4 [shape = 's32[2]{0}', space=sflag, size = 0x8, scoped, tag = 'scoped memory for tpu_custom_call.1']
    %9 = vsyncpa [#allocation4], 0
    %s10 = scalar_lea.sflag [#allocation4], 1
    %11 = vsyncpa %s10, 0
    loop: start=0, step=1, limit=4
    $region2: #{tpu_custom_call.1} parent=1 // loop_pre_header
      _
    $region3: #{tpu_custom_call.1} parent=1 // loop_header
      %s13 = sphi 0, %s17
      %p14 = scmp.ge.s32.totalorder %s13, 4
      %s23 = sphi 0, %s25
      %s26 = sphi 0, %s23
      %s27 = sphi 0, %s26
      %s43 = sphi 0, %s27
      %s47 = sphi 0, %s47
      %s49 = sphi 0, %s47
      %s50 = sphi 0, %s49
      %s64 = sphi 0, %s50
      %s68 = sphi 0, %s68
      %s70 = sphi 0, %s68
      %s71 = sphi 0, %s70
      %s85 = sphi 0, %s71
      %s89 = sphi 0, %s89
      %s91 = sphi 0, %s89
      %s92 = sphi 0, %s91
      %s106 = sphi 0, %s92
      %s112 = sphi 0, %s114
      %s115 = sphi 0, %s112
      %s116 = sphi 0, %s115
      %s132 = sphi 0, %s116
    $region4: #{tpu_custom_call.1} parent=1 // loop_header_branch
      %16 = sbr.rel (%p14) target = $region8
    $region5: #{tpu_custom_call.1} parent=1 // loop_body
      %s18 = ssub.s32 %s13, 1
      %s19 = ssub.s32 %s13, 2
      %s20 = sadd.s32 %s13, 1
      %s21 = ssub.s32 %s13, %s20
      %p22 = scmp.eq.s32.totalorder %s21, 0
      %s24 = sadd.s32 %s23, 1
      %s25 = scalar_select %p22, %s23, %s24
      %p28 = pneg %p22
      %p29 = scmp.eq.s32.totalorder %s13, 1
      %p30 = por %p28, %p29
      %p31 = scmp.ne.s32.totalorder %s23, %s26
      %p32 = scmp.eq.s32.totalorder %s13, 0
      %p33 = por %p31, %p32
      %p34 = scmp.ne.s32.totalorder %s23, %s26
      %p35 = scmp.eq.s32.totalorder %s18, 1
      %p36 = por %p34, %p35
      %p37 = scmp.ne.s32.totalorder %s26, %s27
      %p38 = scmp.eq.s32.totalorder %s18, 0
      %p39 = por %p37, %p38
      %p40 = scmp.ne.s32.totalorder %s26, %s27
      %p41 = scmp.eq.s32.totalorder %s19, 1
      %p42 = por %p40, %p41
      %p44 = scmp.ne.s32.totalorder %s27, %s43
      %p45 = scmp.eq.s32.totalorder %s19, 0
      %p46 = por %p44, %p45
      %s48 = sadd.s32 %s47, 1
      %p51 = scmp.eq.s32.totalorder %s13, 1
      %p52 = scmp.ne.s32.totalorder %s47, %s49
      %p53 = scmp.eq.s32.totalorder %s13, 0
      %p54 = por %p52, %p53
      %p55 = scmp.ne.s32.totalorder %s47, %s49
      %p56 = scmp.eq.s32.totalorder %s18, 1
      %p57 = por %p55, %p56
      %p58 = scmp.ne.s32.totalorder %s49, %s50
      %p59 = scmp.eq.s32.totalorder %s18, 0
      %p60 = por %p58, %p59
      %p61 = scmp.ne.s32.totalorder %s49, %s50
      %p62 = scmp.eq.s32.totalorder %s19, 1
      %p63 = por %p61, %p62
      %p65 = scmp.ne.s32.totalorder %s50, %s64
      %p66 = scmp.eq.s32.totalorder %s19, 0
      %p67 = por %p65, %p66
      %s69 = sadd.s32 %s68, 1
      %p72 = scmp.eq.s32.totalorder %s13, 1
      %p73 = scmp.ne.s32.totalorder %s68, %s70
      %p74 = scmp.eq.s32.totalorder %s13, 0
      %p75 = por %p73, %p74
      %p76 = scmp.ne.s32.totalorder %s68, %s70
      %p77 = scmp.eq.s32.totalorder %s18, 1
      %p78 = por %p76, %p77
      %p79 = scmp.ne.s32.totalorder %s70, %s71
      %p80 = scmp.eq.s32.totalorder %s18, 0
      %p81 = por %p79, %p80
      %p82 = scmp.ne.s32.totalorder %s70, %s71
      %p83 = scmp.eq.s32.totalorder %s19, 1
      %p84 = por %p82, %p83
      %p86 = scmp.ne.s32.totalorder %s71, %s85
      %p87 = scmp.eq.s32.totalorder %s19, 0
      %p88 = por %p86, %p87
      %s90 = sadd.s32 %s89, 1
      %p93 = scmp.eq.s32.totalorder %s13, 1
      %p94 = scmp.ne.s32.totalorder %s89, %s91
      %p95 = scmp.eq.s32.totalorder %s13, 0
      %p96 = por %p94, %p95
      %p97 = scmp.ne.s32.totalorder %s89, %s91
      %p98 = scmp.eq.s32.totalorder %s18, 1
      %p99 = por %p97, %p98
      %p100 = scmp.ne.s32.totalorder %s91, %s92
      %p101 = scmp.eq.s32.totalorder %s18, 0
      %p102 = por %p100, %p101
      %p103 = scmp.ne.s32.totalorder %s91, %s92
      %p104 = scmp.eq.s32.totalorder %s19, 1
      %p105 = por %p103, %p104
      %p107 = scmp.ne.s32.totalorder %s92, %s106
      %p108 = scmp.eq.s32.totalorder %s19, 0
      %p109 = por %p107, %p108
      %s110 = ssub.s32 %s13, %s20
      %p111 = scmp.eq.s32.totalorder %s110, 0
      %s113 = sadd.s32 %s112, 1
      %s114 = scalar_select %p111, %s112, %s113
      %p117 = pneg %p111
      %p118 = scmp.eq.s32.totalorder %s13, 1
      %p119 = por %p117, %p118
      %p120 = scmp.ne.s32.totalorder %s112, %s115
      %p121 = scmp.eq.s32.totalorder %s13, 0
      %p122 = por %p120, %p121
      %p123 = scmp.ne.s32.totalorder %s112, %s115
      %p124 = scmp.eq.s32.totalorder %s18, 1
      %p125 = por %p123, %p124
      %p126 = scmp.ne.s32.totalorder %s115, %s116
      %p127 = scmp.eq.s32.totalorder %s18, 0
      %p128 = por %p126, %p127
      %p129 = scmp.ne.s32.totalorder %s115, %s116
      %p130 = scmp.eq.s32.totalorder %s19, 1
      %p131 = por %p129, %p130
      %p133 = scmp.ne.s32.totalorder %s116, %s132
      %p134 = scmp.eq.s32.totalorder %s19, 0
      %p135 = por %p133, %p134
      %p136 = scmp.le.s32.totalorder 1, %s13
      %p137 = scmp.lt.s32.totalorder %s13, 3
      %p138 = pnand %p136, %p137
      %p139 = pneg %p138
      // Predicated region
      $region9: #{tpu_custom_call.1} parent=5 // pred_check
        _
      $region10: #{tpu_custom_call.1} parent=5 // pred_check_branch
        %141 = sbr.rel (%p138) target = $region12
      $region11: #{tpu_custom_call.1} parent=5 // pred_region
        %s142 = ssub.s32 %s13, 1
        // Predicated region
        $region13: #{tpu_custom_call.1} parent=11 // pred_check
          %p143 = pneg %p60
        $region14: #{tpu_custom_call.1} parent=11 // pred_check_branch
          %145 = sbr.rel (%p143) target = $region16
        $region15: #{tpu_custom_call.1} parent=11 // pred_region
          _
        $region16: #{tpu_custom_call.1} parent=11 // pred_fallthru
          _
        // Predicated region
        $region17: #{tpu_custom_call.1} parent=11 // pred_check
          %p146 = pneg %p81
        $region18: #{tpu_custom_call.1} parent=11 // pred_check_branch
          %148 = sbr.rel (%p146) target = $region20
        $region19: #{tpu_custom_call.1} parent=11 // pred_region
          _
        $region20: #{tpu_custom_call.1} parent=11 // pred_fallthru
          _
        // Predicated region
        $region21: #{tpu_custom_call.1} parent=11 // pred_check
          %p149 = pneg %p102
        $region22: #{tpu_custom_call.1} parent=11 // pred_check_branch
          %151 = sbr.rel (%p149) target = $region24
        $region23: #{tpu_custom_call.1} parent=11 // pred_region
          _
        $region24: #{tpu_custom_call.1} parent=11 // pred_fallthru
          _
      $region12: #{tpu_custom_call.1} parent=5 // pred_fallthru
        _
      %p152 = scmp.lt.s32.totalorder %s13, 2
      // Predicated region
      $region25: #{tpu_custom_call.1} parent=5 // pred_check
        %p153 = pneg %p152
      $region26: #{tpu_custom_call.1} parent=5 // pred_check_branch
        %155 = sbr.rel (%p153) target = $region28
      $region27: #{tpu_custom_call.1} parent=5 // pred_region
        // Predicated region
        $region29: #{tpu_custom_call.1} parent=27 // pred_check
          %p156 = pneg %p33
        $region30: #{tpu_custom_call.1} parent=27 // pred_check_branch
          %158 = sbr.rel (%p156) target = $region32
        $region31: #{tpu_custom_call.1} parent=27 // pred_region
          %p159 = scmp.lt.s32.totalorder %s13, 1
          %s160 = scalar_select %p159, %s13, 1
          %s161 = smul.addr %s160, 9
          %s162 = smul.addr %s161, 4
          %s163 = scalar_lea.vmem %s0, %s162
        $region32: #{tpu_custom_call.1} parent=27 // pred_fallthru
          _
      $region28: #{tpu_custom_call.1} parent=5 // pred_fallthru
        _
      %p164 = scmp.le.s32.totalorder 1, %s13
      %p165 = scmp.lt.s32.totalorder %s13, 3
      %p166 = pnand %p164, %p165
      %p167 = pneg %p166
      // Predicated region
      $region33: #{tpu_custom_call.1} parent=5 // pred_check
        _
      $region34: #{tpu_custom_call.1} parent=5 // pred_check_branch
        %169 = sbr.rel (%p166) target = $region36
      $region35: #{tpu_custom_call.1} parent=5 // pred_region
        %s170 = ssub.s32 %s13, 1
        %p171 = scmp.lt.s32.totalorder %s18, 1
        %s172 = scalar_select %p171, %s18, 1
        %s173 = smul.addr %s172, 9
        %s174 = smul.addr %s173, 4
        %s175 = scalar_lea.vmem %s0, %s174
        %p176 = pneg %p39
        %p177 = pneg %p36
        %p178 = pneg %p60
        %p179 = pneg %p57
        %p180 = pneg %p81
        %p181 = pneg %p78
        %p182 = pneg %p102
        %p183 = pneg %p99
        %p184 = pneg %p128
        %p185 = pneg %p125
        %s186 = sand.u32 %s115, 1
        %s187 = scalar_lea.sflag [#allocation4], %s186
        %s188 = sand.u32 %s115, 1
        %s189 = smul.addr %s188, 2
        %s190 = scalar_lea.vmem [#allocation3], %s189
        %p191 = scmp.lt.s32.totalorder %s18, 1
        %s192 = scalar_select %p191, %s18, 1
        %s193 = smul.addr %s192, 9
        %s194 = smul.addr %s193, 4
        %s195 = scalar_lea.vmem %s0, %s194
        %v197 = vld [vmem:[%s195] sm:$0xf]
        %v198 = vld [vmem:[%s195 + $0x4] sm:$0xf]
        %v199 = vld [vmem:[%s195 + $0x8] sm:$0xf]
        %v200 = vld [vmem:[%s195 + $0xc] sm:$0xf]
        %v201 = vld [vmem:[%s195 + $0x10] sm:$0xf]
        %v202 = vld [vmem:[%s195 + $0x14] sm:$0xf]
        %v203 = vld [vmem:[%s195 + $0x18] sm:$0xf]
        %v204 = vld [vmem:[%s195 + $0x1c] sm:$0xf]
        %v205 = vld [vmem:[%s195 + $0x20] sm:$0x1]
        %v206 = vld [vmem:[%s195] sm:$0xe]
        %v207 = vld [vmem:[%s195 + $0x20] sm:$0x3]
        %v216 = vunpack.c.l.b16 %v197
        %v217 = vunpack.c.l.b16 %v198
        %v218 = vunpack.c.l.b16 %v199
        %v219 = vunpack.c.l.b16 %v200
        %v220 = vunpack.c.l.b16 %v201
        %v221 = vunpack.c.l.b16 %v202
        %v222 = vunpack.c.l.b16 %v203
        %v223 = vunpack.c.l.b16 %v204
        %v224 = vpack.c.b16 %v217, %v216
        %v225 = vpack.c.b16 %v219, %v218
        %v226 = vpack.c.b16 %v221, %v220
        %v227 = vpack.c.b16 %v223, %v222
        %v229 = vunpack.c.l.b16 %v205
        %v230 = vpack.c.b16 %v229, %v229
        %vm231 = vsmask.f32 7424
        %v233 = vshrl.u32 %v224, 16
        %v235 = vshll.u32 %v224, 16
        %v237 = vrot.slane %v235, 1
        %v238 = vor.u32 %v233, %v237
        %v240 = vshll.u32 %v225, 16
        %v242 = vrot.slane %v240, 1
        %v243 = vsel %vm231, %v238, %v242
        %v244 = vshrl.u32 %v225, 16
        %v246 = vor.u32 %v244, %v242
        %v248 = vshll.u32 %v226, 16
        %v250 = vrot.slane %v248, 1
        %v251 = vsel %vm231, %v246, %v250
        %v252 = vshrl.u32 %v226, 16
        %v254 = vor.u32 %v252, %v250
        %v256 = vshll.u32 %v227, 16
        %v258 = vrot.slane %v256, 1
        %v259 = vsel %vm231, %v254, %v258
        %v260 = vshrl.u32 %v227, 16
        %v262 = vor.u32 %v260, %v258
        %v264 = vshll.u32 %v230, 16
        %v266 = vrot.slane %v264, 1
        %v267 = vsel %vm231, %v262, %v266
        %268 = vrot.lane.b32.xlu0 %v243, 64
        %v269 = vpop.permute.xlu0 %268
        %270 = vrot.lane.b32.xlu0 %v251, 64
        %v271 = vpop.permute.xlu0 %270
        %272 = vrot.lane.b32.xlu0 %v259, 64
        %v273 = vpop.permute.xlu0 %272
        %274 = vrot.lane.b32.xlu0 %v267, 64
        %v275 = vpop.permute.xlu0 %274
        %v277 = vunpack.c.l.b16 %v206
        %v278 = vpack.c.b16 %v217, %v277
        %vm279 = vcmask 1046528
        %v280 = vrot.slane %v278, 1
        %v281 = vrot.slane %v225, 1
        %v282 = vsel %vm279, %v280, %v281
        %v283 = vrot.slane %v226, 1
        %v284 = vsel %vm279, %v281, %v283
        %v285 = vrot.slane %v227, 1
        %v286 = vsel %vm279, %v283, %v285
        %v287 = vrot.slane %v230, 1
        %v288 = vsel %vm279, %v285, %v287
        %v290 = vunpack.c.l.b16 %v207
        %v291 = vpack.c.b16 %v290, %v290
        %vm292 = vsmask.f32 6400
        %v294 = vshrl.u32 %v278, 16
        %v296 = vrot.slane %v294, 1
        %v297 = vshll.u32 %v278, 16
        %v299 = vrot.slane %v297, 2
        %v300 = vor.u32 %v296, %v299
        %v301 = vrot.slane %v244, 1
        %v302 = vrot.slane %v240, 2
        %v303 = vor.u32 %v301, %v302
        %v304 = vsel %vm292, %v300, %v303
        %v305 = vrot.slane %v252, 1
        %v306 = vrot.slane %v248, 2
        %v307 = vor.u32 %v305, %v306
        %v308 = vsel %vm292, %v303, %v307
        %v309 = vrot.slane %v260, 1
        %v310 = vrot.slane %v256, 2
        %v311 = vor.u32 %v309, %v310
        %v312 = vsel %vm292, %v307, %v311
        %v314 = vshrl.u32 %v291, 16
        %v316 = vrot.slane %v314, 1
        %v317 = vshll.u32 %v291, 16
        %v319 = vrot.slane %v317, 2
        %v320 = vor.u32 %v316, %v319
        %v321 = vsel %vm292, %v311, %v320
        %322 = vrot.lane.b32.xlu0 %v304, 64
        %v323 = vpop.permute.xlu0 %322
        %324 = vrot.lane.b32.xlu0 %v308, 64
        %v325 = vpop.permute.xlu0 %324
        %326 = vrot.lane.b32.xlu0 %v312, 64
        %v327 = vpop.permute.xlu0 %326
        %328 = vrot.lane.b32.xlu0 %v321, 64
        %v329 = vpop.permute.xlu0 %328
        %vm330 = vcmask 523264
        %v332 = vsel %vm330, %v224, %v269
        %v335 = vsel %vm330, %v225, %v271
        %v338 = vsel %vm330, %v226, %v273
        %v341 = vsel %vm330, %v227, %v275
        %v345 = vsel %vm330, %v282, %v323
        %v349 = vsel %vm330, %v284, %v325
        %v353 = vsel %vm330, %v286, %v327
        %v357 = vsel %vm330, %v288, %v329
        %v359 = vld [vmem:[%s195] sm:$0xc]
        %v360 = vld [vmem:[%s195 + $0x20] sm:$0x7]
        %v361 = vld [vmem:[%s195] sm:$0x8]
        %v362 = vld [vmem:[%s195 + $0x20] sm:$0xf]
        %v364 = vunpack.c.l.b16 %v359
        %v365 = vpack.c.b16 %v217, %v364
        %v367 = vunpack.c.l.b16 %v360
        %v368 = vpack.c.b16 %v367, %v367
        %v370 = vshrl.u32 %v365, 16
        %v372 = vshll.u32 %v365, 16
        %v374 = vrot.slane %v372, 1
        %v375 = vor.u32 %v370, %v374
        %v376 = vsel %vm231, %v375, %v242
        %v378 = vshll.u32 %v368, 16
        %v380 = vrot.slane %v378, 1
        %v381 = vsel %vm231, %v262, %v380
        %v382 = vshrl.u32 %v368, 16
        %v384 = vor.u32 %v382, %v380
        %385 = vrot.lane.b32.xlu0 %v376, 64
        %v386 = vpop.permute.xlu0 %385
        %387 = vrot.lane.b32.xlu0 %v381, 64
        %v388 = vpop.permute.xlu0 %387
        %389 = vrot.lane.b32.xlu0 %v384, 64
        %v390 = vpop.permute.xlu0 %389
        %v392 = vunpack.c.l.b16 %v361
        %v393 = vpack.c.b16 %v217, %v392
        %v394 = vrot.slane %v393, 1
        %v395 = vsel %vm279, %v394, %v281
        %v396 = vrot.slane %v368, 1
        %v397 = vsel %vm279, %v285, %v396
        %v399 = vunpack.c.l.b16 %v362
        %v400 = vpack.c.b16 %v399, %v399
        %v402 = vshrl.u32 %v393, 16
        %v404 = vrot.slane %v402, 1
        %v405 = vshll.u32 %v393, 16
        %v407 = vrot.slane %v405, 2
        %v408 = vor.u32 %v404, %v407
        %v409 = vsel %vm292, %v408, %v303
        %v411 = vshrl.u32 %v400, 16
        %v413 = vrot.slane %v411, 1
        %v414 = vshll.u32 %v400, 16
        %v416 = vrot.slane %v414, 2
        %v417 = vor.u32 %v413, %v416
        %v418 = vsel %vm292, %v311, %v417
        %419 = vrot.lane.b32.xlu0 %v409, 64
        %v420 = vpop.permute.xlu0 %419
        %421 = vrot.lane.b32.xlu0 %v418, 64
        %v422 = vpop.permute.xlu0 %421
        %423 = vrot.lane.b32.xlu0 %v417, 64
        %v424 = vpop.permute.xlu0 %423
        %v426 = vsel %vm330, %v365, %v386
        %v428 = vsel %vm330, %v227, %v388
        %v430 = vsel %vm330, %v291, %v390
        %v433 = vsel %vm330, %v395, %v420
        %v436 = vsel %vm330, %v397, %v422
        %v439 = vsel %vm330, %v396, %v424
        %v440 = vld [vmem:[%s1] sm:$0xf]
        %v441 = vld [vmem:[%s1 + $0x4] sm:$0xf]
        %v442 = vld [vmem:[%s1 + $0x8] sm:$0xf]
        %v443 = vld [vmem:[%s1 + $0xc] sm:$0xf]
        %v444 = vld [vmem:[%s1 + $0x10] sm:$0xf]
        %v445 = vld [vmem:[%s1 + $0x14] sm:$0xf]
        %v446 = vld [vmem:[%s1 + $0x18] sm:$0xf]
        %v447 = vld [vmem:[%s1 + $0x1c] sm:$0xf]
        %v448 = vld [vmem:[%s1 + $0x20] sm:$0xf]
        %v449 = vld [vmem:[%s1 + $0x24] sm:$0xf]
        %v450 = vld [vmem:[%s1 + $0x28] sm:$0xf]
        %v451 = vld [vmem:[%s1 + $0x2c] sm:$0xf]
        %v452 = vld [vmem:[%s1 + $0x30] sm:$0xf]
        %v453 = vld [vmem:[%s1 + $0x34] sm:$0xf]
        %v454 = vld [vmem:[%s1 + $0x38] sm:$0xf]
        %v455 = vld [vmem:[%s1 + $0x3c] sm:$0xf]
        %v456 = vld [vmem:[%s1 + $0x40] sm:$0xf]
        %v457 = vld [vmem:[%s1 + $0x44] sm:$0xf]
        %v458 = vld [vmem:[%s1 + $0x48] sm:$0xf]
        %v459 = vld [vmem:[%s1 + $0x4c] sm:$0xf]
        %v460 = vld [vmem:[%s1 + $0x50] sm:$0xf]
        %v461 = vld [vmem:[%s1 + $0x54] sm:$0xf]
        %v462 = vld [vmem:[%s1 + $0x58] sm:$0xf]
        %v463 = vld [vmem:[%s1 + $0x5c] sm:$0xf]
        %v464 = vld [vmem:[%s1 + $0x60] sm:$0xf]
        %v465 = vld [vmem:[%s1 + $0x64] sm:$0xf]
        %v466 = vld [vmem:[%s1 + $0x68] sm:$0xf]
        %v467 = vld [vmem:[%s1 + $0x6c] sm:$0xf]
        %v468 = vld [vmem:[%s1 + $0x70] sm:$0xf]
        %v469 = vld [vmem:[%s1 + $0x74] sm:$0xf]
        %v470 = vld [vmem:[%s1 + $0x78] sm:$0xf]
        %v471 = vld [vmem:[%s1 + $0x7c] sm:$0xf]
        %v472 = vld [vmem:[%s1 + $0x80] sm:$0xf]
        %v473 = vld [vmem:[%s1 + $0x84] sm:$0xf]
        %v474 = vld [vmem:[%s1 + $0x88] sm:$0xf]
        %v475 = vld [vmem:[%s1 + $0x8c] sm:$0xf]
        %v476 = vld [vmem:[%s1 + $0x90] sm:$0xf]
        %v477 = vld [vmem:[%s1 + $0x94] sm:$0xf]
        %v478 = vld [vmem:[%s1 + $0x98] sm:$0xf]
        %v479 = vld [vmem:[%s1 + $0x9c] sm:$0xf]
        %v480 = vld [vmem:[%s1 + $0xa0] sm:$0xf]
        %v481 = vld [vmem:[%s1 + $0xa4] sm:$0xf]
        %v482 = vld [vmem:[%s1 + $0xa8] sm:$0xf]
        %v483 = vld [vmem:[%s1 + $0xac] sm:$0xf]
        %v484 = vld [vmem:[%s1 + $0xb0] sm:$0xf]
        %v485 = vld [vmem:[%s1 + $0xb4] sm:$0xf]
        %v486 = vld [vmem:[%s1 + $0xb8] sm:$0xf]
        %v487 = vld [vmem:[%s1 + $0xbc] sm:$0xf]
        %v488 = vld [vmem:[%s1 + $0xc0] sm:$0xf]
        %v489 = vld [vmem:[%s1 + $0xc4] sm:$0xf]
        %v490 = vld [vmem:[%s1 + $0xc8] sm:$0xf]
        %v491 = vld [vmem:[%s1 + $0xcc] sm:$0xf]
        %v492 = vld [vmem:[%s1 + $0xd0] sm:$0xf]
        %v493 = vld [vmem:[%s1 + $0xd4] sm:$0xf]
        %v494 = vld [vmem:[%s1 + $0xd8] sm:$0xf]
        %v495 = vld [vmem:[%s1 + $0xdc] sm:$0xf]
        %v496 = vld [vmem:[%s1 + $0xe0] sm:$0xf]
        %v497 = vld [vmem:[%s1 + $0xe4] sm:$0xf]
        %v498 = vld [vmem:[%s1 + $0xe8] sm:$0xf]
        %v499 = vld [vmem:[%s1 + $0xec] sm:$0xf]
        %v500 = vld [vmem:[%s1 + $0xf0] sm:$0xf]
        %v501 = vld [vmem:[%s1 + $0xf4] sm:$0xf]
        %v502 = vld [vmem:[%s1 + $0xf8] sm:$0xf]
        %v503 = vld [vmem:[%s1 + $0xfc] sm:$0xf]
        %vm514 = vcmask 1045504
        %v515 = vrot.slane %v426, 2
        %v516 = vrot.slane %v335, 2
        %v517 = vsel %vm514, %v515, %v516
        %v518 = vrot.slane %v433, 2
        %v519 = vrot.slane %v349, 2
        %v520 = vsel %vm514, %v518, %v519
        %v521 = vrot.slane %v338, 2
        %v522 = vsel %vm514, %v516, %v521
        %v523 = vrot.slane %v353, 2
        %v524 = vsel %vm514, %v519, %v523
        %v525 = vrot.slane %v428, 2
        %v526 = vsel %vm514, %v521, %v525
        %v527 = vrot.slane %v436, 2
        %v528 = vsel %vm514, %v523, %v527
        %v529 = vrot.slane %v430, 2
        %v530 = vsel %vm514, %v525, %v529
        %v531 = vrot.slane %v439, 2
        %v532 = vsel %vm514, %v527, %v531
        %v573 = vunpack.c.l.b16 %v472
        %v574 = vunpack.c.l.b16 %v473
        %v575 = vunpack.c.l.b16 %v474
        %v576 = vunpack.c.l.b16 %v475
        %v577 = vunpack.c.l.b16 %v476
        %v578 = vunpack.c.l.b16 %v477
        %v579 = vunpack.c.l.b16 %v478
        %v580 = vunpack.c.l.b16 %v479
        %v581 = vunpack.c.l.b16 %v480
        %v582 = vunpack.c.l.b16 %v481
        %v583 = vunpack.c.l.b16 %v482
        %v584 = vunpack.c.l.b16 %v483
        %v585 = vunpack.c.l.b16 %v484
        %v586 = vunpack.c.l.b16 %v485
        %v587 = vunpack.c.l.b16 %v486
        %v588 = vunpack.c.l.b16 %v487
        %v589 = vunpack.c.l.b16 %v488
        %v590 = vunpack.c.l.b16 %v489
        %v591 = vunpack.c.l.b16 %v490
        %v592 = vunpack.c.l.b16 %v491
        %v593 = vunpack.c.l.b16 %v492
        %v594 = vunpack.c.l.b16 %v493
        %v595 = vunpack.c.l.b16 %v494
        %v596 = vunpack.c.l.b16 %v495
        %v597 = vunpack.c.l.b16 %v496
        %v598 = vunpack.c.l.b16 %v497
        %v599 = vunpack.c.l.b16 %v498
        %v600 = vunpack.c.l.b16 %v499
        %v601 = vunpack.c.l.b16 %v500
        %v602 = vunpack.c.l.b16 %v501
        %v603 = vunpack.c.l.b16 %v502
        %v604 = vunpack.c.l.b16 %v503
        %v605 = vpack.c.b16 %v574, %v573
        %v606 = vpack.c.b16 %v576, %v575
        %v607 = vpack.c.b16 %v578, %v577
        %v608 = vpack.c.b16 %v580, %v579
        %v609 = vpack.c.b16 %v582, %v581
        %v610 = vpack.c.b16 %v584, %v583
        %v611 = vpack.c.b16 %v586, %v585
        %v612 = vpack.c.b16 %v588, %v587
        %v613 = vpack.c.b16 %v590, %v589
        %v614 = vpack.c.b16 %v592, %v591
        %v615 = vpack.c.b16 %v594, %v593
        %v616 = vpack.c.b16 %v596, %v595
        %v617 = vpack.c.b16 %v598, %v597
        %v618 = vpack.c.b16 %v600, %v599
        %v619 = vpack.c.b16 %v602, %v601
        %v620 = vpack.c.b16 %v604, %v603
        %637 = vmatprep.subr.bf16.mxu0 0
        %638 = vmatpush1.bf16.msra.mxu0 %v605
        %639 = vmatprep.subr.bf16.mxu0 0
        %640 = vmatpush1.bf16.msra.mxu0 %v606
        %641 = vmatprep.subr.bf16.mxu0 0
        %642 = vmatpush1.bf16.msra.mxu0 %v607
        %643 = vmatprep.subr.bf16.mxu0 0
        %644 = vmatpush1.bf16.msra.mxu0 %v608
        %645 = vmatprep.subr.bf16.mxu0 0
        %646 = vmatpush1.bf16.msra.mxu0 %v609
        %647 = vmatprep.subr.bf16.mxu0 0
        %648 = vmatpush1.bf16.msra.mxu0 %v610
        %649 = vmatprep.subr.bf16.mxu0 0
        %650 = vmatpush1.bf16.msra.mxu0 %v611
        %651 = vmatprep.subr.bf16.mxu0 0
        %652 = vmatpush1.bf16.msra.mxu0 %v612
        %653 = vmatprep.subr.bf16.mxu0 0
        %654 = vmatpush1.bf16.msra.mxu0 %v613
        %655 = vmatprep.subr.bf16.mxu0 0
        %656 = vmatpush1.bf16.msra.mxu0 %v614
        %657 = vmatprep.subr.bf16.mxu0 0
        %658 = vmatpush1.bf16.msra.mxu0 %v615
        %659 = vmatprep.subr.bf16.mxu0 0
        %660 = vmatpush1.bf16.msra.mxu0 %v616
        %661 = vmatprep.subr.bf16.mxu0 0
        %662 = vmatpush1.bf16.msra.mxu0 %v617
        %663 = vmatprep.subr.bf16.mxu0 0
        %664 = vmatpush1.bf16.msra.mxu0 %v618
        %665 = vmatprep.subr.bf16.mxu0 0
        %666 = vmatpush1.bf16.msra.mxu0 %v619
        %667 = vmatprep.subr.bf16.mxu0 0
        %668 = vmatpush1.bf16.msra.mxu0 %v620
        %669 = vmatprep.mubr.bf16.mxu0 %v520
        %670 = vmatmul.mubr.bf16.gmra.mrb[0].mxu0 %v517
        %v671 = vpop.f32.mrb[0].mxu0
        %v672 = vadd.f32 0.0, %v671
        %v673 = vpop.f32.mrb[0].mxu0
        %v674 = vpop.f32.mrb[0].mxu0
        %v675 = vadd.f32 0.0, %v674
        %v676 = vpop.f32.mrb[0].mxu0
        %677 = vmatprep.mubr.bf16.mxu0 %v524
        %678 = vmatmul.mubr.bf16.gmra.mrb[0].mxu0 %v522
        %v679 = vpop.f32.mrb[0].mxu0
        %v680 = vadd.f32 0.0, %v679
        %v681 = vpop.f32.mrb[0].mxu0
        %v682 = vpop.f32.mrb[0].mxu0
        %v683 = vadd.f32 0.0, %v682
        %v684 = vpop.f32.mrb[0].mxu0
        %685 = vmatprep.mubr.bf16.mxu0 %v528
        %686 = vmatmul.mubr.bf16.gmra.mrb[0].mxu0 %v526
        %v687 = vpop.f32.mrb[0].mxu0
        %v688 = vadd.f32 0.0, %v687
        %v689 = vpop.f32.mrb[0].mxu0
        %v690 = vpop.f32.mrb[0].mxu0
        %v691 = vadd.f32 0.0, %v690
        %v692 = vpop.f32.mrb[0].mxu0
        %693 = vmatprep.mubr.bf16.mxu0 %v532
        %694 = vmatmul.mubr.bf16.gmra.mrb[0].mxu0 %v530
        %v695 = vpop.f32.mrb[0].mxu0
        %v696 = vadd.f32 0.0, %v695
        %v697 = vpop.f32.mrb[0].mxu0
        %v698 = vpop.f32.mrb[0].mxu0
        %v699 = vadd.f32 0.0, %v698
        %v700 = vpop.f32.mrb[0].mxu0
        %701 = vdwg.mxu0
        %v734 = vunpack.c.l.b16 %v440
        %v735 = vunpack.c.l.b16 %v441
        %v736 = vunpack.c.l.b16 %v442
        %v737 = vunpack.c.l.b16 %v443
        %v738 = vunpack.c.l.b16 %v444
        %v739 = vunpack.c.l.b16 %v445
        %v740 = vunpack.c.l.b16 %v446
        %v741 = vunpack.c.l.b16 %v447
        %v742 = vunpack.c.l.b16 %v448
        %v743 = vunpack.c.l.b16 %v449
        %v744 = vunpack.c.l.b16 %v450
        %v745 = vunpack.c.l.b16 %v451
        %v746 = vunpack.c.l.b16 %v452
        %v747 = vunpack.c.l.b16 %v453
        %v748 = vunpack.c.l.b16 %v454
        %v749 = vunpack.c.l.b16 %v455
        %v750 = vunpack.c.l.b16 %v456
        %v751 = vunpack.c.l.b16 %v457
        %v752 = vunpack.c.l.b16 %v458
        %v753 = vunpack.c.l.b16 %v459
        %v754 = vunpack.c.l.b16 %v460
        %v755 = vunpack.c.l.b16 %v461
        %v756 = vunpack.c.l.b16 %v462
        %v757 = vunpack.c.l.b16 %v463
        %v758 = vunpack.c.l.b16 %v464
        %v759 = vunpack.c.l.b16 %v465
        %v760 = vunpack.c.l.b16 %v466
        %v761 = vunpack.c.l.b16 %v467
        %v762 = vunpack.c.l.b16 %v468
        %v763 = vunpack.c.l.b16 %v469
        %v764 = vunpack.c.l.b16 %v470
        %v765 = vunpack.c.l.b16 %v471
        %v766 = vpack.c.b16 %v735, %v734
        %v767 = vpack.c.b16 %v737, %v736
        %v768 = vpack.c.b16 %v739, %v738
        %v769 = vpack.c.b16 %v741, %v740
        %v770 = vpack.c.b16 %v743, %v742
        %v771 = vpack.c.b16 %v745, %v744
        %v772 = vpack.c.b16 %v747, %v746
        %v773 = vpack.c.b16 %v749, %v748
        %v774 = vpack.c.b16 %v751, %v750
        %v775 = vpack.c.b16 %v753, %v752
        %v776 = vpack.c.b16 %v755, %v754
        %v777 = vpack.c.b16 %v757, %v756
        %v778 = vpack.c.b16 %v759, %v758
        %v779 = vpack.c.b16 %v761, %v760
        %v780 = vpack.c.b16 %v763, %v762
        %v781 = vpack.c.b16 %v765, %v764
        %798 = vmatprep.subr.bf16.mxu0 0
        %799 = vmatpush1.bf16.msra.mxu0 %v766
        %800 = vmatprep.subr.bf16.mxu0 0
        %801 = vmatpush1.bf16.msra.mxu0 %v767
        %802 = vmatprep.subr.bf16.mxu0 0
        %803 = vmatpush1.bf16.msra.mxu0 %v768
        %804 = vmatprep.subr.bf16.mxu0 0
        %805 = vmatpush1.bf16.msra.mxu0 %v769
        %806 = vmatprep.subr.bf16.mxu0 0
        %807 = vmatpush1.bf16.msra.mxu0 %v770
        %808 = vmatprep.subr.bf16.mxu0 0
        %809 = vmatpush1.bf16.msra.mxu0 %v771
        %810 = vmatprep.subr.bf16.mxu0 0
        %811 = vmatpush1.bf16.msra.mxu0 %v772
        %812 = vmatprep.subr.bf16.mxu0 0
        %813 = vmatpush1.bf16.msra.mxu0 %v773
        %814 = vmatprep.subr.bf16.mxu0 0
        %815 = vmatpush1.bf16.msra.mxu0 %v774
        %816 = vmatprep.subr.bf16.mxu0 0
        %817 = vmatpush1.bf16.msra.mxu0 %v775
        %818 = vmatprep.subr.bf16.mxu0 0
        %819 = vmatpush1.bf16.msra.mxu0 %v776
        %820 = vmatprep.subr.bf16.mxu0 0
        %821 = vmatpush1.bf16.msra.mxu0 %v777
        %822 = vmatprep.subr.bf16.mxu0 0
        %823 = vmatpush1.bf16.msra.mxu0 %v778
        %824 = vmatprep.subr.bf16.mxu0 0
        %825 = vmatpush1.bf16.msra.mxu0 %v779
        %826 = vmatprep.subr.bf16.mxu0 0
        %827 = vmatpush1.bf16.msra.mxu0 %v780
        %828 = vmatprep.subr.bf16.mxu0 0
        %829 = vmatpush1.bf16.msra.mxu0 %v781
        %830 = vmatprep.mubr.bf16.mxu0 %v345
        %831 = vmatmul.mubr.bf16.gmra.mrb[0].mxu0 %v332
        %v832 = vpop.f32.mrb[0].mxu0
        %v833 = vadd.f32 %v672, %v832
        %v834 = vpop.f32.mrb[0].mxu0
        %v835 = vpop.f32.mrb[0].mxu0
        %v836 = vadd.f32 %v675, %v835
        %v837 = vpop.f32.mrb[0].mxu0
        %838 = vmatprep.mubr.bf16.mxu0 %v349
        %839 = vmatmul.mubr.bf16.gmra.mrb[0].mxu0 %v335
        %v840 = vpop.f32.mrb[0].mxu0
        %v841 = vadd.f32 %v680, %v840
        %v842 = vpop.f32.mrb[0].mxu0
        %v843 = vpop.f32.mrb[0].mxu0
        %v844 = vadd.f32 %v683, %v843
        %v845 = vpop.f32.mrb[0].mxu0
        %846 = vmatprep.mubr.bf16.mxu0 %v353
        %847 = vmatmul.mubr.bf16.gmra.mrb[0].mxu0 %v338
        %v848 = vpop.f32.mrb[0].mxu0
        %v849 = vadd.f32 %v688, %v848
        %v850 = vpop.f32.mrb[0].mxu0
        %v851 = vpop.f32.mrb[0].mxu0
        %v852 = vadd.f32 %v691, %v851
        %v853 = vpop.f32.mrb[0].mxu0
        %854 = vmatprep.mubr.bf16.mxu0 %v357
        %855 = vmatmul.mubr.bf16.gmra.mrb[0].mxu0 %v341
        %v856 = vpop.f32.mrb[0].mxu0
        %v857 = vadd.f32 %v696, %v856
        %v858 = vpop.f32.mrb[0].mxu0
        %v859 = vpop.f32.mrb[0].mxu0
        %v860 = vadd.f32 %v699, %v859
        %v861 = vpop.f32.mrb[0].mxu0
        %862 = vdwg.mxu0
        %v863 = vld [vmem:[%s2] sm:$0x1]
        %v864 = vlaneseq
        %v865 = vshrl.u32 %v864, 7
        %v866 = vsub.s32 0, %v865
        %v867 = vrot.slane %v863, %v866
        %v868 = vmul.f32 %v833, %v867
        %v869 = vmul.f32 %v836, %v867
        %v870 = vmul.f32 %v841, %v867
        %v871 = vmul.f32 %v844, %v867
        %v872 = vmul.f32 %v849, %v867
        %v873 = vmul.f32 %v852, %v867
        %v874 = vmul.f32 %v857, %v867
        %v875 = vmul.f32 %v860, %v867
        %v876 = vld [vmem:[%s2 + $0x1] sm:$0x1]
        %v877 = vlaneseq
        %v878 = vshrl.u32 %v877, 7
        %v879 = vsub.s32 0, %v878
        %v880 = vrot.slane %v876, %v879
        %v881 = vadd.f32 %v868, %v880
        %v882 = vadd.f32 %v869, %v880
        %v883 = vadd.f32 %v870, %v880
        %v884 = vadd.f32 %v871, %v880
        %v885 = vadd.f32 %v872, %v880
        %v886 = vadd.f32 %v873, %v880
        %v887 = vadd.f32 %v874, %v880
        %v888 = vadd.f32 %v875, %v880
        %v889 = vmax.f32 %v881, 0.0
        %v890 = vmax.f32 %v882, 0.0
        %v891 = vmax.f32 %v883, 0.0
        %v892 = vmax.f32 %v884, 0.0
        %v893 = vmax.f32 %v885, 0.0
        %v894 = vmax.f32 %v886, 0.0
        %v895 = vmax.f32 %v887, 0.0
        %v896 = vmax.f32 %v888, 0.0
        %v897 = vsel %vm330, %v889, -inf
        %v898 = vrot.slane %v897, 4
        %v899 = vmax.f32 %v897, %v898
        %v900 = vrot.slane %v899, 2
        %v901 = vmax.f32 %v899, %v900
        %v902 = vrot.slane %v901, 1
        %v903 = vmax.f32 %v901, %v902
        %v904 = vsel %vm330, %v890, -inf
        %v905 = vrot.slane %v904, 4
        %v906 = vmax.f32 %v904, %v905
        %v907 = vrot.slane %v906, 2
        %v908 = vmax.f32 %v906, %v907
        %v909 = vrot.slane %v908, 1
        %v910 = vmax.f32 %v908, %v909
        %v911 = vsel %vm330, %v891, -inf
        %v912 = vrot.slane %v911, 4
        %v913 = vmax.f32 %v911, %v912
        %v914 = vrot.slane %v913, 2
        %v915 = vmax.f32 %v913, %v914
        %v916 = vrot.slane %v915, 1
        %v917 = vmax.f32 %v915, %v916
        %v918 = vsel %vm330, %v892, -inf
        %v919 = vrot.slane %v918, 4
        %v920 = vmax.f32 %v918, %v919
        %v921 = vrot.slane %v920, 2
        %v922 = vmax.f32 %v920, %v921
        %v923 = vrot.slane %v922, 1
        %v924 = vmax.f32 %v922, %v923
        %v925 = vsel %vm330, %v893, -inf
        %v926 = vrot.slane %v925, 4
        %v927 = vmax.f32 %v925, %v926
        %v928 = vrot.slane %v927, 2
        %v929 = vmax.f32 %v927, %v928
        %v930 = vrot.slane %v929, 1
        %v931 = vmax.f32 %v929, %v930
        %v932 = vsel %vm330, %v894, -inf
        %v933 = vrot.slane %v932, 4
        %v934 = vmax.f32 %v932, %v933
        %v935 = vrot.slane %v934, 2
        %v936 = vmax.f32 %v934, %v935
        %v937 = vrot.slane %v936, 1
        %v938 = vmax.f32 %v936, %v937
        %v939 = vsel %vm330, %v895, -inf
        %v940 = vrot.slane %v939, 4
        %v941 = vmax.f32 %v939, %v940
        %v942 = vrot.slane %v941, 2
        %v943 = vmax.f32 %v941, %v942
        %v944 = vrot.slane %v943, 1
        %v945 = vmax.f32 %v943, %v944
        %v946 = vsel %vm330, %v896, -inf
        %v947 = vrot.slane %v946, 4
        %v948 = vmax.f32 %v946, %v947
        %v949 = vrot.slane %v948, 2
        %v950 = vmax.f32 %v948, %v949
        %v951 = vrot.slane %v950, 1
        %v952 = vmax.f32 %v950, %v951
        %v953 = vpack.c.bf16 %v903, %v903
        %v954 = vpack.c.bf16 %v910, %v910
        %v955 = vpack.c.bf16 %v917, %v917
        %v956 = vpack.c.bf16 %v924, %v924
        %v957 = vpack.c.bf16 %v931, %v931
        %v958 = vpack.c.bf16 %v938, %v938
        %v959 = vpack.c.bf16 %v945, %v945
        %v960 = vpack.c.bf16 %v952, %v952
        %v969 = vunpack.c.l.b16 %v953
        %v970 = vunpack.c.l.b16 %v954
        %v971 = vunpack.c.l.b16 %v955
        %v972 = vunpack.c.l.b16 %v956
        %v973 = vunpack.c.l.b16 %v957
        %v974 = vunpack.c.l.b16 %v958
        %v975 = vunpack.c.l.b16 %v959
        %v976 = vunpack.c.l.b16 %v960
        %vm977 = vcmask 1043459
        %v978 = vsel %vm977, %v970, %v969
        %vm979 = vcmask 1044484
        %v980 = vsel %vm979, %v971, %v978
        %vm981 = vcmask 1045509
        %v982 = vsel %vm981, %v972, %v980
        %vm983 = vcmask 1046534
        %v984 = vsel %vm983, %v973, %v982
        %vm985 = vcmask 1047559
        %v986 = vsel %vm985, %v974, %v984
        %vm987 = vcmask 1041409
        %v988 = vsel %vm987, %v976, %v975
        %v989 = vpack.c.b16 %v988, %v986
        %vm990 = vcmask 1040384
        %v993 = vsel %vm990, 0, %v989
        %vm994 = vcmask 1044480
        %v995 = vsel %vm994, %v993, 0
        %v997 = vunpack.c.l.b16 %v995
        %v998 = vunpack.c.h.b16 %v995
        %v999 = vpack.c.b16 %v997, %v997
        %v1000 = vpack.c.b16 %v998, %v998
        %vm1003 = vcmask 519168
        %1004 = vst.msk [vmem:[#allocation2] sm:$0xf] %vm1003, %v999
        %vm1005 = vcmask 518144
        %vm1006 = vsmask.f32 2304
        %vm1007 = vmand %vm1005, %vm1006
        %v1008 = vld [vmem:[#allocation2 + $0x4] sm:$0x7]
        %v1009 = vsel %vm1007, %v1000, %v1008
        %1010 = vst [vmem:[#allocation2 + $0x4] sm:$0x7] %v1009
        %v1011 = vld [vmem:[#allocation2] sm:$0xf]
        %v1012 = vld [vmem:[#allocation2 + $0x4] sm:$0x1]
        %v1013 = vld [vmem:[#allocation2] sm:$0xe]
        %v1014 = vld [vmem:[#allocation2 + $0x4] sm:$0x3]
        %v1015 = vld [vmem:[#allocation2] sm:$0xc]
        %v1016 = vld [vmem:[#allocation2 + $0x4] sm:$0x7]
        %v1019 = vunpack.c.l.b16 %v1011
        %v1020 = vunpack.c.l.b16 %v1012
        %v1021 = vpack.c.b16 %v1020, %v1019
        %v1023 = vshrl.u32 %v1021, 16
        %v1025 = vshll.u32 %v1021, 16
        %v1027 = vrot.slane %v1025, 1
        %v1028 = vor.u32 %v1023, %v1027
        %1029 = vrot.lane.b32.xlu0 %v1028, 64
        %v1030 = vpop.permute.xlu0 %1029
        %v1032 = vunpack.c.l.b16 %v1013
        %v1033 = vpack.c.b16 %v1020, %v1032
        %v1034 = vrot.slane %v1033, 1
        %v1036 = vunpack.c.l.b16 %v1014
        %v1037 = vpack.c.b16 %v1036, %v1032
        %v1039 = vshrl.u32 %v1037, 16
        %v1041 = vrot.slane %v1039, 1
        %v1042 = vshll.u32 %v1037, 16
        %v1044 = vrot.slane %v1042, 2
        %v1045 = vor.u32 %v1041, %v1044
        %1046 = vrot.lane.b32.xlu0 %v1045, 64
        %v1047 = vpop.permute.xlu0 %1046
        %v1049 = vunpack.c.l.b16 %v1015
        %v1050 = vpack.c.b16 %v1036, %v1049
        %v1051 = vrot.slane %v1050, 2
        %v1053 = vunpack.c.l.b16 %v1016
        %v1054 = vpack.c.b16 %v1053, %v1049
        %v1056 = vshrl.u32 %v1054, 16
        %v1058 = vrot.slane %v1056, 2
        %v1059 = vshll.u32 %v1054, 16
        %v1061 = vrot.slane %v1059, 3
        %v1062 = vor.u32 %v1058, %v1061
        %1063 = vrot.lane.b32.xlu0 %v1062, 64
        %v1064 = vpop.permute.xlu0 %1063
        %v1067 = vsel %vm330, %v1011, %v1030
        %v1071 = vsel %vm330, %v1034, %v1047
        %v1075 = vsel %vm330, %v1051, %v1064
        %v1077 = vld [vmem:[%s3] sm:$0xf]
        %v1078 = vld [vmem:[%s3 + $0x4] sm:$0xf]
        %v1079 = vld [vmem:[%s3 + $0x8] sm:$0xf]
        %v1080 = vld [vmem:[%s3 + $0xc] sm:$0xf]
        %v1081 = vld [vmem:[%s3 + $0x10] sm:$0xf]
        %v1082 = vld [vmem:[%s3 + $0x14] sm:$0xf]
        %v1083 = vld [vmem:[%s3 + $0x18] sm:$0xf]
        %v1084 = vld [vmem:[%s3 + $0x1c] sm:$0xf]
        %v1085 = vld [vmem:[%s3 + $0x20] sm:$0xf]
        %v1086 = vld [vmem:[%s3 + $0x24] sm:$0xf]
        %v1087 = vld [vmem:[%s3 + $0x28] sm:$0xf]
        %v1088 = vld [vmem:[%s3 + $0x2c] sm:$0xf]
        %v1089 = vld [vmem:[%s3 + $0x30] sm:$0xf]
        %v1090 = vld [vmem:[%s3 + $0x34] sm:$0xf]
        %v1091 = vld [vmem:[%s3 + $0x38] sm:$0xf]
        %v1092 = vld [vmem:[%s3 + $0x3c] sm:$0xf]
        %v1093 = vld [vmem:[%s3 + $0x40] sm:$0xf]
        %v1094 = vld [vmem:[%s3 + $0x44] sm:$0xf]
        %v1095 = vld [vmem:[%s3 + $0x48] sm:$0xf]
        %v1096 = vld [vmem:[%s3 + $0x4c] sm:$0xf]
        %v1097 = vld [vmem:[%s3 + $0x50] sm:$0xf]
        %v1098 = vld [vmem:[%s3 + $0x54] sm:$0xf]
        %v1099 = vld [vmem:[%s3 + $0x58] sm:$0xf]
        %v1100 = vld [vmem:[%s3 + $0x5c] sm:$0xf]
        %v1101 = vld [vmem:[%s3 + $0x60] sm:$0xf]
        %v1102 = vld [vmem:[%s3 + $0x64] sm:$0xf]
        %v1103 = vld [vmem:[%s3 + $0x68] sm:$0xf]
        %v1104 = vld [vmem:[%s3 + $0x6c] sm:$0xf]
        %v1105 = vld [vmem:[%s3 + $0x70] sm:$0xf]
        %v1106 = vld [vmem:[%s3 + $0x74] sm:$0xf]
        %v1107 = vld [vmem:[%s3 + $0x78] sm:$0xf]
        %v1108 = vld [vmem:[%s3 + $0x7c] sm:$0xf]
        %v1109 = vld [vmem:[%s3 + $0x80] sm:$0xf]
        %v1110 = vld [vmem:[%s3 + $0x84] sm:$0xf]
        %v1111 = vld [vmem:[%s3 + $0x88] sm:$0xf]
        %v1112 = vld [vmem:[%s3 + $0x8c] sm:$0xf]
        %v1113 = vld [vmem:[%s3 + $0x90] sm:$0xf]
        %v1114 = vld [vmem:[%s3 + $0x94] sm:$0xf]
        %v1115 = vld [vmem:[%s3 + $0x98] sm:$0xf]
        %v1116 = vld [vmem:[%s3 + $0x9c] sm:$0xf]
        %v1117 = vld [vmem:[%s3 + $0xa0] sm:$0xf]
        %v1118 = vld [vmem:[%s3 + $0xa4] sm:$0xf]
        %v1119 = vld [vmem:[%s3 + $0xa8] sm:$0xf]
        %v1120 = vld [vmem:[%s3 + $0xac] sm:$0xf]
        %v1121 = vld [vmem:[%s3 + $0xb0] sm:$0xf]
        %v1122 = vld [vmem:[%s3 + $0xb4] sm:$0xf]
        %v1123 = vld [vmem:[%s3 + $0xb8] sm:$0xf]
        %v1124 = vld [vmem:[%s3 + $0xbc] sm:$0xf]
        %v1173 = vunpack.c.l.b16 %v1077
        %v1174 = vunpack.c.l.b16 %v1078
        %v1175 = vunpack.c.l.b16 %v1079
        %v1176 = vunpack.c.l.b16 %v1080
        %v1177 = vunpack.c.l.b16 %v1081
        %v1178 = vunpack.c.l.b16 %v1082
        %v1179 = vunpack.c.l.b16 %v1083
        %v1180 = vunpack.c.l.b16 %v1084
        %v1181 = vunpack.c.l.b16 %v1085
        %v1182 = vunpack.c.l.b16 %v1086
        %v1183 = vunpack.c.l.b16 %v1087
        %v1184 = vunpack.c.l.b16 %v1088
        %v1185 = vunpack.c.l.b16 %v1089
        %v1186 = vunpack.c.l.b16 %v1090
        %v1187 = vunpack.c.l.b16 %v1091
        %v1188 = vunpack.c.l.b16 %v1092
        %v1189 = vunpack.c.l.b16 %v1093
        %v1190 = vunpack.c.l.b16 %v1094
        %v1191 = vunpack.c.l.b16 %v1095
        %v1192 = vunpack.c.l.b16 %v1096
        %v1193 = vunpack.c.l.b16 %v1097
        %v1194 = vunpack.c.l.b16 %v1098
        %v1195 = vunpack.c.l.b16 %v1099
        %v1196 = vunpack.c.l.b16 %v1100
        %v1197 = vunpack.c.l.b16 %v1101
        %v1198 = vunpack.c.l.b16 %v1102
        %v1199 = vunpack.c.l.b16 %v1103
        %v1200 = vunpack.c.l.b16 %v1104
        %v1201 = vunpack.c.l.b16 %v1105
        %v1202 = vunpack.c.l.b16 %v1106
        %v1203 = vunpack.c.l.b16 %v1107
        %v1204 = vunpack.c.l.b16 %v1108
        %v1205 = vunpack.c.l.b16 %v1109
        %v1206 = vunpack.c.l.b16 %v1110
        %v1207 = vunpack.c.l.b16 %v1111
        %v1208 = vunpack.c.l.b16 %v1112
        %v1209 = vunpack.c.l.b16 %v1113
        %v1210 = vunpack.c.l.b16 %v1114
        %v1211 = vunpack.c.l.b16 %v1115
        %v1212 = vunpack.c.l.b16 %v1116
        %v1213 = vunpack.c.l.b16 %v1117
        %v1214 = vunpack.c.l.b16 %v1118
        %v1215 = vunpack.c.l.b16 %v1119
        %v1216 = vunpack.c.l.b16 %v1120
        %v1217 = vunpack.c.l.b16 %v1121
        %v1218 = vunpack.c.l.b16 %v1122
        %v1219 = vunpack.c.l.b16 %v1123
        %v1220 = vunpack.c.l.b16 %v1124
        %v1221 = vpack.c.b16 %v1174, %v1173
        %v1222 = vpack.c.b16 %v1176, %v1175
        %v1223 = vpack.c.b16 %v1178, %v1177
        %v1224 = vpack.c.b16 %v1180, %v1179
        %v1225 = vpack.c.b16 %v1182, %v1181
        %v1226 = vpack.c.b16 %v1184, %v1183
        %v1227 = vpack.c.b16 %v1186, %v1185
        %v1228 = vpack.c.b16 %v1188, %v1187
        %v1229 = vpack.c.b16 %v1190, %v1189
        %v1230 = vpack.c.b16 %v1192, %v1191
        %v1231 = vpack.c.b16 %v1194, %v1193
        %v1232 = vpack.c.b16 %v1196, %v1195
        %v1233 = vpack.c.b16 %v1198, %v1197
        %v1234 = vpack.c.b16 %v1200, %v1199
        %v1235 = vpack.c.b16 %v1202, %v1201
        %v1236 = vpack.c.b16 %v1204, %v1203
        %v1237 = vpack.c.b16 %v1206, %v1205
        %v1238 = vpack.c.b16 %v1208, %v1207
        %v1239 = vpack.c.b16 %v1210, %v1209
        %v1240 = vpack.c.b16 %v1212, %v1211
        %v1241 = vpack.c.b16 %v1214, %v1213
        %v1242 = vpack.c.b16 %v1216, %v1215
        %v1243 = vpack.c.b16 %v1218, %v1217
        %v1244 = vpack.c.b16 %v1220, %v1219
        %1269 = vmatprep.subr.bf16.mxu0 0
        %1270 = vmatpush1.bf16.msra.mxu0 %v1221
        %1271 = vmatprep.subr.bf16.mxu0 0
        %1272 = vmatpush1.bf16.msra.mxu0 %v1222
        %1273 = vmatprep.subr.bf16.mxu0 0
        %1274 = vmatpush1.bf16.msra.mxu0 %v1223
        %1275 = vmatprep.subr.bf16.mxu0 0
        %1276 = vmatpush1.bf16.msra.mxu0 %v1224
        %1277 = vmatprep.subr.bf16.mxu0 0
        %1278 = vmatpush1.bf16.msra.mxu0 %v1225
        %1279 = vmatprep.subr.bf16.mxu0 0
        %1280 = vmatpush1.bf16.msra.mxu0 %v1226
        %1281 = vmatprep.subr.bf16.mxu0 0
        %1282 = vmatpush1.bf16.msra.mxu0 %v1227
        %1283 = vmatprep.subr.bf16.mxu0 0
        %1284 = vmatpush1.bf16.msra.mxu0 %v1228
        %1285 = vmatprep.subr.bf16.mxu0 0
        %1286 = vmatpush1.bf16.msra.mxu0 %v1229
        %1287 = vmatprep.subr.bf16.mxu0 0
        %1288 = vmatpush1.bf16.msra.mxu0 %v1230
        %1289 = vmatprep.subr.bf16.mxu0 0
        %1290 = vmatpush1.bf16.msra.mxu0 %v1231
        %1291 = vmatprep.subr.bf16.mxu0 0
        %1292 = vmatpush1.bf16.msra.mxu0 %v1232
        %1293 = vmatprep.subr.bf16.mxu0 0
        %1294 = vmatpush1.bf16.msra.mxu0 %v1233
        %1295 = vmatprep.subr.bf16.mxu0 0
        %1296 = vmatpush1.bf16.msra.mxu0 %v1234
        %1297 = vmatprep.subr.bf16.mxu0 0
        %1298 = vmatpush1.bf16.msra.mxu0 %v1235
        %1299 = vmatprep.subr.bf16.mxu0 0
        %1300 = vmatpush1.bf16.msra.mxu0 %v1236
        %1301 = vmatprep.mubr.bf16.mxu0 %v1071
        %1302 = vmatmul.mubr.bf16.gmra.mrb[0].mxu0 %v1067
        %v1303 = vpop.f32.mrb[0].mxu0
        %v1304 = vadd.f32 0.0, %v1303
        %v1305 = vpop.f32.mrb[0].mxu0
        %v1306 = vpop.f32.mrb[0].mxu0
        %v1307 = vpop.f32.mrb[0].mxu0
        %1308 = vdwg.mxu0
        %1309 = vmatprep.subr.bf16.mxu0 0
        %1310 = vmatpush1.bf16.msra.mxu0 %v1237
        %1311 = vmatprep.subr.bf16.mxu0 0
        %1312 = vmatpush1.bf16.msra.mxu0 %v1238
        %1313 = vmatprep.subr.bf16.mxu0 0
        %1314 = vmatpush1.bf16.msra.mxu0 %v1239
        %1315 = vmatprep.subr.bf16.mxu0 0
        %1316 = vmatpush1.bf16.msra.mxu0 %v1240
        %1317 = vmatprep.subr.bf16.mxu0 0
        %1318 = vmatpush1.bf16.msra.mxu0 %v1241
        %1319 = vmatprep.subr.bf16.mxu0 0
        %1320 = vmatpush1.bf16.msra.mxu0 %v1242
        %1321 = vmatprep.subr.bf16.mxu0 0
        %1322 = vmatpush1.bf16.msra.mxu0 %v1243
        %1323 = vmatprep.subr.bf16.mxu0 0
        %1324 = vmatpush1.bf16.msra.mxu0 %v1244
        %1325 = vmatprep.subr.bf16.mxu0 0
        %1326 = vmatpush1.bf16.msra.mxu0 0
        %1327 = vmatprep.subr.bf16.mxu0 0
        %1328 = vmatpush1.bf16.msra.mxu0 0
        %1329 = vmatprep.subr.bf16.mxu0 0
        %1330 = vmatpush1.bf16.msra.mxu0 0
        %1331 = vmatprep.subr.bf16.mxu0 0
        %1332 = vmatpush1.bf16.msra.mxu0 0
        %1333 = vmatprep.subr.bf16.mxu0 0
        %1334 = vmatpush1.bf16.msra.mxu0 0
        %1335 = vmatprep.subr.bf16.mxu0 0
        %1336 = vmatpush1.bf16.msra.mxu0 0
        %1337 = vmatprep.subr.bf16.mxu0 0
        %1338 = vmatpush1.bf16.msra.mxu0 0
        %1339 = vmatprep.subr.bf16.mxu0 0
        %1340 = vmatpush1.bf16.msra.mxu0 0
        %1341 = vmatprep.mubr.bf16.mxu0 0
        %1342 = vmatmul.mubr.bf16.gmra.mrb[0].mxu0 %v1075
        %v1343 = vpop.f32.mrb[0].mxu0
        %v1344 = vadd.f32 %v1304, %v1343
        %v1345 = vpop.f32.mrb[0].mxu0
        %v1346 = vpop.f32.mrb[0].mxu0
        %v1347 = vpop.f32.mrb[0].mxu0
        %1348 = vdwg.mxu0
        %v1349 = vld [vmem:[%s2 + $0x2] sm:$0x1]
        %v1350 = vld [vmem:[%s2 + $0x3] sm:$0x1]
        %v1351 = vlaneseq
        %v1352 = vshrl.u32 %v1351, 7
        %v1353 = vsub.s32 0, %v1352
        %v1354 = vrot.slane %v1349, %v1353
        %v1355 = vmul.f32 %v1344, %v1354
        %v1356 = vlaneseq
        %v1357 = vshrl.u32 %v1356, 7
        %v1358 = vsub.s32 0, %v1357
        %v1359 = vrot.slane %v1350, %v1358
        %v1360 = vadd.f32 %v1355, %v1359
        %v1361 = vmax.f32 %v1360, 0.0
        %v1362 = vpack.c.bf16 %v1361, %v1361
        %v1364 = vrot.slane %v1362, 7
        %v1366 = vsel %vm990, 0, %v1364
        %v1367 = vsel %vm994, %v1366, 0
        %v1369 = vunpack.c.l.b16 %v1367
        %v1370 = vunpack.c.h.b16 %v1367
        %v1371 = vpack.c.b16 %v1369, %v1369
        %v1372 = vpack.c.b16 %v1370, %v1370
        %1375 = vst.msk [vmem:[#allocation2] sm:$0xf] %vm1003, %v1371
        %v1376 = vld [vmem:[#allocation2 + $0x4] sm:$0x7]
        %v1377 = vsel %vm1007, %v1372, %v1376
        %1378 = vst [vmem:[#allocation2 + $0x4] sm:$0x7] %v1377
        %v1379 = vld [vmem:[#allocation2] sm:$0xf]
        %v1380 = vld [vmem:[#allocation2 + $0x4] sm:$0x1]
        %v1381 = vld [vmem:[#allocation2] sm:$0xe]
        %v1382 = vld [vmem:[#allocation2 + $0x4] sm:$0x3]
        %v1383 = vld [vmem:[#allocation2] sm:$0xc]
        %v1384 = vld [vmem:[#allocation2 + $0x4] sm:$0x7]
        %v1387 = vunpack.c.l.b16 %v1379
        %v1388 = vunpack.c.l.b16 %v1380
        %v1389 = vpack.c.b16 %v1388, %v1387
        %v1391 = vshrl.u32 %v1389, 16
        %v1393 = vshll.u32 %v1389, 16
        %v1395 = vrot.slane %v1393, 1
        %v1396 = vor.u32 %v1391, %v1395
        %1397 = vrot.lane.b32.xlu0 %v1396, 64
        %v1398 = vpop.permute.xlu0 %1397
        %v1400 = vunpack.c.l.b16 %v1381
        %v1401 = vpack.c.b16 %v1388, %v1400
        %v1402 = vrot.slane %v1401, 1
        %v1404 = vunpack.c.l.b16 %v1382
        %v1405 = vpack.c.b16 %v1404, %v1400
        %v1407 = vshrl.u32 %v1405, 16
        %v1409 = vrot.slane %v1407, 1
        %v1410 = vshll.u32 %v1405, 16
        %v1412 = vrot.slane %v1410, 2
        %v1413 = vor.u32 %v1409, %v1412
        %1414 = vrot.lane.b32.xlu0 %v1413, 64
        %v1415 = vpop.permute.xlu0 %1414
        %v1417 = vunpack.c.l.b16 %v1383
        %v1418 = vpack.c.b16 %v1404, %v1417
        %v1419 = vrot.slane %v1418, 2
        %v1421 = vunpack.c.l.b16 %v1384
        %v1422 = vpack.c.b16 %v1421, %v1417
        %v1424 = vshrl.u32 %v1422, 16
        %v1426 = vrot.slane %v1424, 2
        %v1427 = vshll.u32 %v1422, 16
        %v1429 = vrot.slane %v1427, 3
        %v1430 = vor.u32 %v1426, %v1429
        %1431 = vrot.lane.b32.xlu0 %v1430, 64
        %v1432 = vpop.permute.xlu0 %1431
        %v1435 = vsel %vm330, %v1379, %v1398
        %v1439 = vsel %vm330, %v1402, %v1415
        %v1443 = vsel %vm330, %v1419, %v1432
        %s1445 = scalar_lea.vmem %s3, 192
        %v1446 = vld [vmem:[%s1445] sm:$0xf]
        %v1447 = vld [vmem:[%s1445 + $0x4] sm:$0xf]
        %v1448 = vld [vmem:[%s1445 + $0x8] sm:$0xf]
        %v1449 = vld [vmem:[%s1445 + $0xc] sm:$0xf]
        %v1450 = vld [vmem:[%s1445 + $0x10] sm:$0xf]
        %v1451 = vld [vmem:[%s1445 + $0x14] sm:$0xf]
        %v1452 = vld [vmem:[%s1445 + $0x18] sm:$0xf]
        %v1453 = vld [vmem:[%s1445 + $0x1c] sm:$0xf]
        %v1454 = vld [vmem:[%s1445 + $0x20] sm:$0xf]
        %v1455 = vld [vmem:[%s1445 + $0x24] sm:$0xf]
        %v1456 = vld [vmem:[%s1445 + $0x28] sm:$0xf]
        %v1457 = vld [vmem:[%s1445 + $0x2c] sm:$0xf]
        %v1458 = vld [vmem:[%s1445 + $0x30] sm:$0xf]
        %v1459 = vld [vmem:[%s1445 + $0x34] sm:$0xf]
        %v1460 = vld [vmem:[%s1445 + $0x38] sm:$0xf]
        %v1461 = vld [vmem:[%s1445 + $0x3c] sm:$0xf]
        %v1462 = vld [vmem:[%s1445 + $0x40] sm:$0xf]
        %v1463 = vld [vmem:[%s1445 + $0x44] sm:$0xf]
        %v1464 = vld [vmem:[%s1445 + $0x48] sm:$0xf]
        %v1465 = vld [vmem:[%s1445 + $0x4c] sm:$0xf]
        %v1466 = vld [vmem:[%s1445 + $0x50] sm:$0xf]
        %v1467 = vld [vmem:[%s1445 + $0x54] sm:$0xf]
        %v1468 = vld [vmem:[%s1445 + $0x58] sm:$0xf]
        %v1469 = vld [vmem:[%s1445 + $0x5c] sm:$0xf]
        %v1470 = vld [vmem:[%s1445 + $0x60] sm:$0xf]
        %v1471 = vld [vmem:[%s1445 + $0x64] sm:$0xf]
        %v1472 = vld [vmem:[%s1445 + $0x68] sm:$0xf]
        %v1473 = vld [vmem:[%s1445 + $0x6c] sm:$0xf]
        %v1474 = vld [vmem:[%s1445 + $0x70] sm:$0xf]
        %v1475 = vld [vmem:[%s1445 + $0x74] sm:$0xf]
        %v1476 = vld [vmem:[%s1445 + $0x78] sm:$0xf]
        %v1477 = vld [vmem:[%s1445 + $0x7c] sm:$0xf]
        %v1478 = vld [vmem:[%s1445 + $0x80] sm:$0xf]
        %v1479 = vld [vmem:[%s1445 + $0x84] sm:$0xf]
        %v1480 = vld [vmem:[%s1445 + $0x88] sm:$0xf]
        %v1481 = vld [vmem:[%s1445 + $0x8c] sm:$0xf]
        %v1482 = vld [vmem:[%s1445 + $0x90] sm:$0xf]
        %v1483 = vld [vmem:[%s1445 + $0x94] sm:$0xf]
        %v1484 = vld [vmem:[%s1445 + $0x98] sm:$0xf]
        %v1485 = vld [vmem:[%s1445 + $0x9c] sm:$0xf]
        %v1486 = vld [vmem:[%s1445 + $0xa0] sm:$0xf]
        %v1487 = vld [vmem:[%s1445 + $0xa4] sm:$0xf]
        %v1488 = vld [vmem:[%s1445 + $0xa8] sm:$0xf]
        %v1489 = vld [vmem:[%s1445 + $0xac] sm:$0xf]
        %v1490 = vld [vmem:[%s1445 + $0xb0] sm:$0xf]
        %v1491 = vld [vmem:[%s1445 + $0xb4] sm:$0xf]
        %v1492 = vld [vmem:[%s1445 + $0xb8] sm:$0xf]
        %v1493 = vld [vmem:[%s1445 + $0xbc] sm:$0xf]
        %v1542 = vunpack.c.l.b16 %v1446
        %v1543 = vunpack.c.l.b16 %v1447
        %v1544 = vunpack.c.l.b16 %v1448
        %v1545 = vunpack.c.l.b16 %v1449
        %v1546 = vunpack.c.l.b16 %v1450
        %v1547 = vunpack.c.l.b16 %v1451
        %v1548 = vunpack.c.l.b16 %v1452
        %v1549 = vunpack.c.l.b16 %v1453
        %v1550 = vunpack.c.l.b16 %v1454
        %v1551 = vunpack.c.l.b16 %v1455
        %v1552 = vunpack.c.l.b16 %v1456
        %v1553 = vunpack.c.l.b16 %v1457
        %v1554 = vunpack.c.l.b16 %v1458
        %v1555 = vunpack.c.l.b16 %v1459
        %v1556 = vunpack.c.l.b16 %v1460
        %v1557 = vunpack.c.l.b16 %v1461
        %v1558 = vunpack.c.l.b16 %v1462
        %v1559 = vunpack.c.l.b16 %v1463
        %v1560 = vunpack.c.l.b16 %v1464
        %v1561 = vunpack.c.l.b16 %v1465
        %v1562 = vunpack.c.l.b16 %v1466
        %v1563 = vunpack.c.l.b16 %v1467
        %v1564 = vunpack.c.l.b16 %v1468
        %v1565 = vunpack.c.l.b16 %v1469
        %v1566 = vunpack.c.l.b16 %v1470
        %v1567 = vunpack.c.l.b16 %v1471
        %v1568 = vunpack.c.l.b16 %v1472
        %v1569 = vunpack.c.l.b16 %v1473
        %v1570 = vunpack.c.l.b16 %v1474
        %v1571 = vunpack.c.l.b16 %v1475
        %v1572 = vunpack.c.l.b16 %v1476
        %v1573 = vunpack.c.l.b16 %v1477
        %v1574 = vunpack.c.l.b16 %v1478
        %v1575 = vunpack.c.l.b16 %v1479
        %v1576 = vunpack.c.l.b16 %v1480
        %v1577 = vunpack.c.l.b16 %v1481
        %v1578 = vunpack.c.l.b16 %v1482
        %v1579 = vunpack.c.l.b16 %v1483
        %v1580 = vunpack.c.l.b16 %v1484
        %v1581 = vunpack.c.l.b16 %v1485
        %v1582 = vunpack.c.l.b16 %v1486
        %v1583 = vunpack.c.l.b16 %v1487
        %v1584 = vunpack.c.l.b16 %v1488
        %v1585 = vunpack.c.l.b16 %v1489
        %v1586 = vunpack.c.l.b16 %v1490
        %v1587 = vunpack.c.l.b16 %v1491
        %v1588 = vunpack.c.l.b16 %v1492
        %v1589 = vunpack.c.l.b16 %v1493
        %v1590 = vpack.c.b16 %v1543, %v1542
        %v1591 = vpack.c.b16 %v1545, %v1544
        %v1592 = vpack.c.b16 %v1547, %v1546
        %v1593 = vpack.c.b16 %v1549, %v1548
        %v1594 = vpack.c.b16 %v1551, %v1550
        %v1595 = vpack.c.b16 %v1553, %v1552
        %v1596 = vpack.c.b16 %v1555, %v1554
        %v1597 = vpack.c.b16 %v1557, %v1556
        %v1598 = vpack.c.b16 %v1559, %v1558
        %v1599 = vpack.c.b16 %v1561, %v1560
        %v1600 = vpack.c.b16 %v1563, %v1562
        %v1601 = vpack.c.b16 %v1565, %v1564
        %v1602 = vpack.c.b16 %v1567, %v1566
        %v1603 = vpack.c.b16 %v1569, %v1568
        %v1604 = vpack.c.b16 %v1571, %v1570
        %v1605 = vpack.c.b16 %v1573, %v1572
        %v1606 = vpack.c.b16 %v1575, %v1574
        %v1607 = vpack.c.b16 %v1577, %v1576
        %v1608 = vpack.c.b16 %v1579, %v1578
        %v1609 = vpack.c.b16 %v1581, %v1580
        %v1610 = vpack.c.b16 %v1583, %v1582
        %v1611 = vpack.c.b16 %v1585, %v1584
        %v1612 = vpack.c.b16 %v1587, %v1586
        %v1613 = vpack.c.b16 %v1589, %v1588
        %1638 = vmatprep.subr.bf16.mxu0 0
        %1639 = vmatpush1.bf16.msra.mxu0 %v1590
        %1640 = vmatprep.subr.bf16.mxu0 0
        %1641 = vmatpush1.bf16.msra.mxu0 %v1591
        %1642 = vmatprep.subr.bf16.mxu0 0
        %1643 = vmatpush1.bf16.msra.mxu0 %v1592
        %1644 = vmatprep.subr.bf16.mxu0 0
        %1645 = vmatpush1.bf16.msra.mxu0 %v1593
        %1646 = vmatprep.subr.bf16.mxu0 0
        %1647 = vmatpush1.bf16.msra.mxu0 %v1594
        %1648 = vmatprep.subr.bf16.mxu0 0
        %1649 = vmatpush1.bf16.msra.mxu0 %v1595
        %1650 = vmatprep.subr.bf16.mxu0 0
        %1651 = vmatpush1.bf16.msra.mxu0 %v1596
        %1652 = vmatprep.subr.bf16.mxu0 0
        %1653 = vmatpush1.bf16.msra.mxu0 %v1597
        %1654 = vmatprep.subr.bf16.mxu0 0
        %1655 = vmatpush1.bf16.msra.mxu0 %v1598
        %1656 = vmatprep.subr.bf16.mxu0 0
        %1657 = vmatpush1.bf16.msra.mxu0 %v1599
        %1658 = vmatprep.subr.bf16.mxu0 0
        %1659 = vmatpush1.bf16.msra.mxu0 %v1600
        %1660 = vmatprep.subr.bf16.mxu0 0
        %1661 = vmatpush1.bf16.msra.mxu0 %v1601
        %1662 = vmatprep.subr.bf16.mxu0 0
        %1663 = vmatpush1.bf16.msra.mxu0 %v1602
        %1664 = vmatprep.subr.bf16.mxu0 0
        %1665 = vmatpush1.bf16.msra.mxu0 %v1603
        %1666 = vmatprep.subr.bf16.mxu0 0
        %1667 = vmatpush1.bf16.msra.mxu0 %v1604
        %1668 = vmatprep.subr.bf16.mxu0 0
        %1669 = vmatpush1.bf16.msra.mxu0 %v1605
        %1670 = vmatprep.mubr.bf16.mxu0 %v1439
        %1671 = vmatmul.mubr.bf16.gmra.mrb[0].mxu0 %v1435
        %v1672 = vpop.f32.mrb[0].mxu0
        %v1673 = vadd.f32 0.0, %v1672
        %v1674 = vpop.f32.mrb[0].mxu0
        %v1675 = vpop.f32.mrb[0].mxu0
        %v1676 = vpop.f32.mrb[0].mxu0
        %1677 = vdwg.mxu0
        %1678 = vmatprep.subr.bf16.mxu0 0
        %1679 = vmatpush1.bf16.msra.mxu0 %v1606
        %1680 = vmatprep.subr.bf16.mxu0 0
        %1681 = vmatpush1.bf16.msra.mxu0 %v1607
        %1682 = vmatprep.subr.bf16.mxu0 0
        %1683 = vmatpush1.bf16.msra.mxu0 %v1608
        %1684 = vmatprep.subr.bf16.mxu0 0
        %1685 = vmatpush1.bf16.msra.mxu0 %v1609
        %1686 = vmatprep.subr.bf16.mxu0 0
        %1687 = vmatpush1.bf16.msra.mxu0 %v1610
        %1688 = vmatprep.subr.bf16.mxu0 0
        %1689 = vmatpush1.bf16.msra.mxu0 %v1611
        %1690 = vmatprep.subr.bf16.mxu0 0
        %1691 = vmatpush1.bf16.msra.mxu0 %v1612
        %1692 = vmatprep.subr.bf16.mxu0 0
        %1693 = vmatpush1.bf16.msra.mxu0 %v1613
        %1694 = vmatprep.subr.bf16.mxu0 0
        %1695 = vmatpush1.bf16.msra.mxu0 0
        %1696 = vmatprep.subr.bf16.mxu0 0
        %1697 = vmatpush1.bf16.msra.mxu0 0
        %1698 = vmatprep.subr.bf16.mxu0 0
        %1699 = vmatpush1.bf16.msra.mxu0 0
        %1700 = vmatprep.subr.bf16.mxu0 0
        %1701 = vmatpush1.bf16.msra.mxu0 0
        %1702 = vmatprep.subr.bf16.mxu0 0
        %1703 = vmatpush1.bf16.msra.mxu0 0
        %1704 = vmatprep.subr.bf16.mxu0 0
        %1705 = vmatpush1.bf16.msra.mxu0 0
        %1706 = vmatprep.subr.bf16.mxu0 0
        %1707 = vmatpush1.bf16.msra.mxu0 0
        %1708 = vmatprep.subr.bf16.mxu0 0
        %1709 = vmatpush1.bf16.msra.mxu0 0
        %1710 = vmatprep.mubr.bf16.mxu0 0
        %1711 = vmatmul.mubr.bf16.gmra.mrb[0].mxu0 %v1443
        %v1712 = vpop.f32.mrb[0].mxu0
        %v1713 = vadd.f32 %v1673, %v1712
        %v1714 = vpop.f32.mrb[0].mxu0
        %v1715 = vpop.f32.mrb[0].mxu0
        %v1716 = vpop.f32.mrb[0].mxu0
        %1717 = vdwg.mxu0
        %v1718 = vld [vmem:[%s2 + $0x4] sm:$0x1]
        %v1719 = vld [vmem:[%s2 + $0x5] sm:$0x1]
        %v1720 = vlaneseq
        %v1721 = vshrl.u32 %v1720, 7
        %v1722 = vsub.s32 0, %v1721
        %v1723 = vrot.slane %v1718, %v1722
        %v1724 = vmul.f32 %v1713, %v1723
        %v1725 = vlaneseq
        %v1726 = vshrl.u32 %v1725, 7
        %v1727 = vsub.s32 0, %v1726
        %v1728 = vrot.slane %v1719, %v1727
        %v1729 = vadd.f32 %v1724, %v1728
        %v1730 = vmax.f32 %v1729, 0.0
        %v1731 = vpack.c.bf16 %v1730, %v1730
        %v1733 = vrot.slane %v1731, 7
        %v1735 = vsel %vm990, 0, %v1733
        %v1736 = vsel %vm994, %v1735, 0
        %v1738 = vunpack.c.l.b16 %v1736
        %v1739 = vunpack.c.h.b16 %v1736
        %v1740 = vpack.c.b16 %v1738, %v1738
        %v1741 = vpack.c.b16 %v1739, %v1739
        %1744 = vst.msk [vmem:[#allocation2] sm:$0xf] %vm1003, %v1740
        %v1745 = vld [vmem:[#allocation2 + $0x4] sm:$0x7]
        %v1746 = vsel %vm1007, %v1741, %v1745
        %1747 = vst [vmem:[#allocation2 + $0x4] sm:$0x7] %v1746
        %v1748 = vld [vmem:[#allocation2] sm:$0xf]
        %v1749 = vld [vmem:[#allocation2 + $0x4] sm:$0x1]
        %v1750 = vld [vmem:[#allocation2] sm:$0xe]
        %v1751 = vld [vmem:[#allocation2 + $0x4] sm:$0x3]
        %v1752 = vld [vmem:[#allocation2] sm:$0xc]
        %v1753 = vld [vmem:[#allocation2 + $0x4] sm:$0x7]
        %v1756 = vunpack.c.l.b16 %v1748
        %v1757 = vunpack.c.l.b16 %v1749
        %v1758 = vpack.c.b16 %v1757, %v1756
        %v1760 = vshrl.u32 %v1758, 16
        %v1762 = vshll.u32 %v1758, 16
        %v1764 = vrot.slane %v1762, 1
        %v1765 = vor.u32 %v1760, %v1764
        %1766 = vrot.lane.b32.xlu0 %v1765, 64
        %v1767 = vpop.permute.xlu0 %1766
        %v1769 = vunpack.c.l.b16 %v1750
        %v1770 = vpack.c.b16 %v1757, %v1769
        %v1771 = vrot.slane %v1770, 1
        %v1773 = vunpack.c.l.b16 %v1751
        %v1774 = vpack.c.b16 %v1773, %v1769
        %v1776 = vshrl.u32 %v1774, 16
        %v1778 = vrot.slane %v1776, 1
        %v1779 = vshll.u32 %v1774, 16
        %v1781 = vrot.slane %v1779, 2
        %v1782 = vor.u32 %v1778, %v1781
        %1783 = vrot.lane.b32.xlu0 %v1782, 64
        %v1784 = vpop.permute.xlu0 %1783
        %v1786 = vunpack.c.l.b16 %v1752
        %v1787 = vpack.c.b16 %v1773, %v1786
        %v1788 = vrot.slane %v1787, 2
        %v1790 = vunpack.c.l.b16 %v1753
        %v1791 = vpack.c.b16 %v1790, %v1786
        %v1793 = vshrl.u32 %v1791, 16
        %v1795 = vrot.slane %v1793, 2
        %v1796 = vshll.u32 %v1791, 16
        %v1798 = vrot.slane %v1796, 3
        %v1799 = vor.u32 %v1795, %v1798
        %1800 = vrot.lane.b32.xlu0 %v1799, 64
        %v1801 = vpop.permute.xlu0 %1800
        %v1804 = vsel %vm330, %v1748, %v1767
        %v1808 = vsel %vm330, %v1771, %v1784
        %v1812 = vsel %vm330, %v1788, %v1801
        %s1814 = scalar_lea.vmem %s3, 384
        %v1815 = vld [vmem:[%s1814] sm:$0xf]
        %v1816 = vld [vmem:[%s1814 + $0x4] sm:$0xf]
        %v1817 = vld [vmem:[%s1814 + $0x8] sm:$0xf]
        %v1818 = vld [vmem:[%s1814 + $0xc] sm:$0xf]
        %v1819 = vld [vmem:[%s1814 + $0x10] sm:$0xf]
        %v1820 = vld [vmem:[%s1814 + $0x14] sm:$0xf]
        %v1821 = vld [vmem:[%s1814 + $0x18] sm:$0xf]
        %v1822 = vld [vmem:[%s1814 + $0x1c] sm:$0xf]
        %v1823 = vld [vmem:[%s1814 + $0x20] sm:$0xf]
        %v1824 = vld [vmem:[%s1814 + $0x24] sm:$0xf]
        %v1825 = vld [vmem:[%s1814 + $0x28] sm:$0xf]
        %v1826 = vld [vmem:[%s1814 + $0x2c] sm:$0xf]
        %v1827 = vld [vmem:[%s1814 + $0x30] sm:$0xf]
        %v1828 = vld [vmem:[%s1814 + $0x34] sm:$0xf]
        %v1829 = vld [vmem:[%s1814 + $0x38] sm:$0xf]
        %v1830 = vld [vmem:[%s1814 + $0x3c] sm:$0xf]
        %v1831 = vld [vmem:[%s1814 + $0x40] sm:$0xf]
        %v1832 = vld [vmem:[%s1814 + $0x44] sm:$0xf]
        %v1833 = vld [vmem:[%s1814 + $0x48] sm:$0xf]
        %v1834 = vld [vmem:[%s1814 + $0x4c] sm:$0xf]
        %v1835 = vld [vmem:[%s1814 + $0x50] sm:$0xf]
        %v1836 = vld [vmem:[%s1814 + $0x54] sm:$0xf]
        %v1837 = vld [vmem:[%s1814 + $0x58] sm:$0xf]
        %v1838 = vld [vmem:[%s1814 + $0x5c] sm:$0xf]
        %v1839 = vld [vmem:[%s1814 + $0x60] sm:$0xf]
        %v1840 = vld [vmem:[%s1814 + $0x64] sm:$0xf]
        %v1841 = vld [vmem:[%s1814 + $0x68] sm:$0xf]
        %v1842 = vld [vmem:[%s1814 + $0x6c] sm:$0xf]
        %v1843 = vld [vmem:[%s1814 + $0x70] sm:$0xf]
        %v1844 = vld [vmem:[%s1814 + $0x74] sm:$0xf]
        %v1845 = vld [vmem:[%s1814 + $0x78] sm:$0xf]
        %v1846 = vld [vmem:[%s1814 + $0x7c] sm:$0xf]
        %v1847 = vld [vmem:[%s1814 + $0x80] sm:$0xf]
        %v1848 = vld [vmem:[%s1814 + $0x84] sm:$0xf]
        %v1849 = vld [vmem:[%s1814 + $0x88] sm:$0xf]
        %v1850 = vld [vmem:[%s1814 + $0x8c] sm:$0xf]
        %v1851 = vld [vmem:[%s1814 + $0x90] sm:$0xf]
        %v1852 = vld [vmem:[%s1814 + $0x94] sm:$0xf]
        %v1853 = vld [vmem:[%s1814 + $0x98] sm:$0xf]
        %v1854 = vld [vmem:[%s1814 + $0x9c] sm:$0xf]
        %v1855 = vld [vmem:[%s1814 + $0xa0] sm:$0xf]
        %v1856 = vld [vmem:[%s1814 + $0xa4] sm:$0xf]
        %v1857 = vld [vmem:[%s1814 + $0xa8] sm:$0xf]
        %v1858 = vld [vmem:[%s1814 + $0xac] sm:$0xf]
        %v1859 = vld [vmem:[%s1814 + $0xb0] sm:$0xf]
        %v1860 = vld [vmem:[%s1814 + $0xb4] sm:$0xf]
        %v1861 = vld [vmem:[%s1814 + $0xb8] sm:$0xf]
        %v1862 = vld [vmem:[%s1814 + $0xbc] sm:$0xf]
        %v1911 = vunpack.c.l.b16 %v1815
        %v1912 = vunpack.c.l.b16 %v1816
        %v1913 = vunpack.c.l.b16 %v1817
        %v1914 = vunpack.c.l.b16 %v1818
        %v1915 = vunpack.c.l.b16 %v1819
        %v1916 = vunpack.c.l.b16 %v1820
        %v1917 = vunpack.c.l.b16 %v1821
        %v1918 = vunpack.c.l.b16 %v1822
        %v1919 = vunpack.c.l.b16 %v1823
        %v1920 = vunpack.c.l.b16 %v1824
        %v1921 = vunpack.c.l.b16 %v1825
        %v1922 = vunpack.c.l.b16 %v1826
        %v1923 = vunpack.c.l.b16 %v1827
        %v1924 = vunpack.c.l.b16 %v1828
        %v1925 = vunpack.c.l.b16 %v1829
        %v1926 = vunpack.c.l.b16 %v1830
        %v1927 = vunpack.c.l.b16 %v1831
        %v1928 = vunpack.c.l.b16 %v1832
        %v1929 = vunpack.c.l.b16 %v1833
        %v1930 = vunpack.c.l.b16 %v1834
        %v1931 = vunpack.c.l.b16 %v1835
        %v1932 = vunpack.c.l.b16 %v1836
        %v1933 = vunpack.c.l.b16 %v1837
        %v1934 = vunpack.c.l.b16 %v1838
        %v1935 = vunpack.c.l.b16 %v1839
        %v1936 = vunpack.c.l.b16 %v1840
        %v1937 = vunpack.c.l.b16 %v1841
        %v1938 = vunpack.c.l.b16 %v1842
        %v1939 = vunpack.c.l.b16 %v1843
        %v1940 = vunpack.c.l.b16 %v1844
        %v1941 = vunpack.c.l.b16 %v1845
        %v1942 = vunpack.c.l.b16 %v1846
        %v1943 = vunpack.c.l.b16 %v1847
        %v1944 = vunpack.c.l.b16 %v1848
        %v1945 = vunpack.c.l.b16 %v1849
        %v1946 = vunpack.c.l.b16 %v1850
        %v1947 = vunpack.c.l.b16 %v1851
        %v1948 = vunpack.c.l.b16 %v1852
        %v1949 = vunpack.c.l.b16 %v1853
        %v1950 = vunpack.c.l.b16 %v1854
        %v1951 = vunpack.c.l.b16 %v1855
        %v1952 = vunpack.c.l.b16 %v1856
        %v1953 = vunpack.c.l.b16 %v1857
        %v1954 = vunpack.c.l.b16 %v1858
        %v1955 = vunpack.c.l.b16 %v1859
        %v1956 = vunpack.c.l.b16 %v1860
        %v1957 = vunpack.c.l.b16 %v1861
        %v1958 = vunpack.c.l.b16 %v1862
        %v1959 = vpack.c.b16 %v1912, %v1911
        %v1960 = vpack.c.b16 %v1914, %v1913
        %v1961 = vpack.c.b16 %v1916, %v1915
        %v1962 = vpack.c.b16 %v1918, %v1917
        %v1963 = vpack.c.b16 %v1920, %v1919
        %v1964 = vpack.c.b16 %v1922, %v1921
        %v1965 = vpack.c.b16 %v1924, %v1923
        %v1966 = vpack.c.b16 %v1926, %v1925
        %v1967 = vpack.c.b16 %v1928, %v1927
        %v1968 = vpack.c.b16 %v1930, %v1929
        %v1969 = vpack.c.b16 %v1932, %v1931
        %v1970 = vpack.c.b16 %v1934, %v1933
        %v1971 = vpack.c.b16 %v1936, %v1935
        %v1972 = vpack.c.b16 %v1938, %v1937
        %v1973 = vpack.c.b16 %v1940, %v1939
        %v1974 = vpack.c.b16 %v1942, %v1941
        %v1975 = vpack.c.b16 %v1944, %v1943
        %v1976 = vpack.c.b16 %v1946, %v1945
        %v1977 = vpack.c.b16 %v1948, %v1947
        %v1978 = vpack.c.b16 %v1950, %v1949
        %v1979 = vpack.c.b16 %v1952, %v1951
        %v1980 = vpack.c.b16 %v1954, %v1953
        %v1981 = vpack.c.b16 %v1956, %v1955
        %v1982 = vpack.c.b16 %v1958, %v1957
        %2007 = vmatprep.subr.bf16.mxu0 0
        %2008 = vmatpush1.bf16.msra.mxu0 %v1959
        %2009 = vmatprep.subr.bf16.mxu0 0
        %2010 = vmatpush1.bf16.msra.mxu0 %v1960
        %2011 = vmatprep.subr.bf16.mxu0 0
        %2012 = vmatpush1.bf16.msra.mxu0 %v1961
        %2013 = vmatprep.subr.bf16.mxu0 0
        %2014 = vmatpush1.bf16.msra.mxu0 %v1962
        %2015 = vmatprep.subr.bf16.mxu0 0
        %2016 = vmatpush1.bf16.msra.mxu0 %v1963
        %2017 = vmatprep.subr.bf16.mxu0 0
        %2018 = vmatpush1.bf16.msra.mxu0 %v1964
        %2019 = vmatprep.subr.bf16.mxu0 0
        %2020 = vmatpush1.bf16.msra.mxu0 %v1965
        %2021 = vmatprep.subr.bf16.mxu0 0
        %2022 = vmatpush1.bf16.msra.mxu0 %v1966
        %2023 = vmatprep.subr.bf16.mxu0 0
        %2024 = vmatpush1.bf16.msra.mxu0 %v1967
        %2025 = vmatprep.subr.bf16.mxu0 0
        %2026 = vmatpush1.bf16.msra.mxu0 %v1968
        %2027 = vmatprep.subr.bf16.mxu0 0
        %2028 = vmatpush1.bf16.msra.mxu0 %v1969
        %2029 = vmatprep.subr.bf16.mxu0 0
        %2030 = vmatpush1.bf16.msra.mxu0 %v1970
        %2031 = vmatprep.subr.bf16.mxu0 0
        %2032 = vmatpush1.bf16.msra.mxu0 %v1971
        %2033 = vmatprep.subr.bf16.mxu0 0
        %2034 = vmatpush1.bf16.msra.mxu0 %v1972
        %2035 = vmatprep.subr.bf16.mxu0 0
        %2036 = vmatpush1.bf16.msra.mxu0 %v1973
        %2037 = vmatprep.subr.bf16.mxu0 0
        %2038 = vmatpush1.bf16.msra.mxu0 %v1974
        %2039 = vmatprep.mubr.bf16.mxu0 %v1808
        %2040 = vmatmul.mubr.bf16.gmra.mrb[0].mxu0 %v1804
        %v2041 = vpop.f32.mrb[0].mxu0
        %v2042 = vadd.f32 0.0, %v2041
        %v2043 = vpop.f32.mrb[0].mxu0
        %v2044 = vpop.f32.mrb[0].mxu0
        %v2045 = vpop.f32.mrb[0].mxu0
        %2046 = vdwg.mxu0
        %2047 = vmatprep.subr.bf16.mxu0 0
        %2048 = vmatpush1.bf16.msra.mxu0 %v1975
        %2049 = vmatprep.subr.bf16.mxu0 0
        %2050 = vmatpush1.bf16.msra.mxu0 %v1976
        %2051 = vmatprep.subr.bf16.mxu0 0
        %2052 = vmatpush1.bf16.msra.mxu0 %v1977
        %2053 = vmatprep.subr.bf16.mxu0 0
        %2054 = vmatpush1.bf16.msra.mxu0 %v1978
        %2055 = vmatprep.subr.bf16.mxu0 0
        %2056 = vmatpush1.bf16.msra.mxu0 %v1979
        %2057 = vmatprep.subr.bf16.mxu0 0
        %2058 = vmatpush1.bf16.msra.mxu0 %v1980
        %2059 = vmatprep.subr.bf16.mxu0 0
        %2060 = vmatpush1.bf16.msra.mxu0 %v1981
        %2061 = vmatprep.subr.bf16.mxu0 0
        %2062 = vmatpush1.bf16.msra.mxu0 %v1982
        %2063 = vmatprep.subr.bf16.mxu0 0
        %2064 = vmatpush1.bf16.msra.mxu0 0
        %2065 = vmatprep.subr.bf16.mxu0 0
        %2066 = vmatpush1.bf16.msra.mxu0 0
        %2067 = vmatprep.subr.bf16.mxu0 0
        %2068 = vmatpush1.bf16.msra.mxu0 0
        %2069 = vmatprep.subr.bf16.mxu0 0
        %2070 = vmatpush1.bf16.msra.mxu0 0
        %2071 = vmatprep.subr.bf16.mxu0 0
        %2072 = vmatpush1.bf16.msra.mxu0 0
        %2073 = vmatprep.subr.bf16.mxu0 0
        %2074 = vmatpush1.bf16.msra.mxu0 0
        %2075 = vmatprep.subr.bf16.mxu0 0
        %2076 = vmatpush1.bf16.msra.mxu0 0
        %2077 = vmatprep.subr.bf16.mxu0 0
        %2078 = vmatpush1.bf16.msra.mxu0 0
        %2079 = vmatprep.mubr.bf16.mxu0 0
        %2080 = vmatmul.mubr.bf16.gmra.mrb[0].mxu0 %v1812
        %v2081 = vpop.f32.mrb[0].mxu0
        %v2082 = vadd.f32 %v2042, %v2081
        %v2083 = vpop.f32.mrb[0].mxu0
        %v2084 = vpop.f32.mrb[0].mxu0
        %v2085 = vpop.f32.mrb[0].mxu0
        %2086 = vdwg.mxu0
        %v2087 = vld [vmem:[%s2 + $0x6] sm:$0x1]
        %v2088 = vld [vmem:[%s2 + $0x7] sm:$0x1]
        %v2089 = vlaneseq
        %v2090 = vshrl.u32 %v2089, 7
        %v2091 = vsub.s32 0, %v2090
        %v2092 = vrot.slane %v2087, %v2091
        %v2093 = vmul.f32 %v2082, %v2092
        %v2094 = vlaneseq
        %v2095 = vshrl.u32 %v2094, 7
        %v2096 = vsub.s32 0, %v2095
        %v2097 = vrot.slane %v2088, %v2096
        %v2098 = vadd.f32 %v2093, %v2097
        %v2099 = vmax.f32 %v2098, 0.0
        %v2100 = vpack.c.bf16 %v2099, %v2099
        %v2102 = vrot.slane %v2100, 7
        %v2104 = vsel %vm990, 0, %v2102
        %v2105 = vsel %vm994, %v2104, 0
        %v2107 = vunpack.c.l.b16 %v2105
        %v2108 = vunpack.c.h.b16 %v2105
        %v2109 = vpack.c.b16 %v2107, %v2107
        %v2110 = vpack.c.b16 %v2108, %v2108
        %2113 = vst.msk [vmem:[#allocation2] sm:$0xf] %vm1003, %v2109
        %v2114 = vld [vmem:[#allocation2 + $0x4] sm:$0x7]
        %v2115 = vsel %vm1007, %v2110, %v2114
        %2116 = vst [vmem:[#allocation2 + $0x4] sm:$0x7] %v2115
        %v2117 = vld [vmem:[#allocation2] sm:$0xf]
        %v2118 = vld [vmem:[#allocation2 + $0x4] sm:$0x1]
        %v2119 = vld [vmem:[#allocation2] sm:$0xe]
        %v2120 = vld [vmem:[#allocation2 + $0x4] sm:$0x3]
        %v2121 = vld [vmem:[#allocation2] sm:$0xc]
        %v2122 = vld [vmem:[#allocation2 + $0x4] sm:$0x7]
        %v2125 = vunpack.c.l.b16 %v2117
        %v2126 = vunpack.c.l.b16 %v2118
        %v2127 = vpack.c.b16 %v2126, %v2125
        %v2129 = vshrl.u32 %v2127, 16
        %v2131 = vshll.u32 %v2127, 16
        %v2133 = vrot.slane %v2131, 1
        %v2134 = vor.u32 %v2129, %v2133
        %2135 = vrot.lane.b32.xlu0 %v2134, 64
        %v2136 = vpop.permute.xlu0 %2135
        %v2138 = vunpack.c.l.b16 %v2119
        %v2139 = vpack.c.b16 %v2126, %v2138
        %v2140 = vrot.slane %v2139, 1
        %v2142 = vunpack.c.l.b16 %v2120
        %v2143 = vpack.c.b16 %v2142, %v2138
        %v2145 = vshrl.u32 %v2143, 16
        %v2147 = vrot.slane %v2145, 1
        %v2148 = vshll.u32 %v2143, 16
        %v2150 = vrot.slane %v2148, 2
        %v2151 = vor.u32 %v2147, %v2150
        %2152 = vrot.lane.b32.xlu0 %v2151, 64
        %v2153 = vpop.permute.xlu0 %2152
        %v2155 = vunpack.c.l.b16 %v2121
        %v2156 = vpack.c.b16 %v2142, %v2155
        %v2157 = vrot.slane %v2156, 2
        %v2159 = vunpack.c.l.b16 %v2122
        %v2160 = vpack.c.b16 %v2159, %v2155
        %v2162 = vshrl.u32 %v2160, 16
        %v2164 = vrot.slane %v2162, 2
        %v2165 = vshll.u32 %v2160, 16
        %v2167 = vrot.slane %v2165, 3
        %v2168 = vor.u32 %v2164, %v2167
        %2169 = vrot.lane.b32.xlu0 %v2168, 64
        %v2170 = vpop.permute.xlu0 %2169
        %v2173 = vsel %vm330, %v2117, %v2136
        %v2177 = vsel %vm330, %v2140, %v2153
        %v2181 = vsel %vm330, %v2157, %v2170
        %s2183 = scalar_lea.vmem %s3, 576
        %v2184 = vld [vmem:[%s2183] sm:$0xf]
        %v2185 = vld [vmem:[%s2183 + $0x4] sm:$0xf]
        %v2186 = vld [vmem:[%s2183 + $0x8] sm:$0xf]
        %v2187 = vld [vmem:[%s2183 + $0xc] sm:$0xf]
        %v2188 = vld [vmem:[%s2183 + $0x10] sm:$0xf]
        %v2189 = vld [vmem:[%s2183 + $0x14] sm:$0xf]
        %v2190 = vld [vmem:[%s2183 + $0x18] sm:$0xf]
        %v2191 = vld [vmem:[%s2183 + $0x1c] sm:$0xf]
        %v2192 = vld [vmem:[%s2183 + $0x20] sm:$0xf]
        %v2193 = vld [vmem:[%s2183 + $0x24] sm:$0xf]
        %v2194 = vld [vmem:[%s2183 + $0x28] sm:$0xf]
        %v2195 = vld [vmem:[%s2183 + $0x2c] sm:$0xf]
        %v2196 = vld [vmem:[%s2183 + $0x30] sm:$0xf]
        %v2197 = vld [vmem:[%s2183 + $0x34] sm:$0xf]
        %v2198 = vld [vmem:[%s2183 + $0x38] sm:$0xf]
        %v2199 = vld [vmem:[%s2183 + $0x3c] sm:$0xf]
        %v2200 = vld [vmem:[%s2183 + $0x40] sm:$0xf]
        %v2201 = vld [vmem:[%s2183 + $0x44] sm:$0xf]
        %v2202 = vld [vmem:[%s2183 + $0x48] sm:$0xf]
        %v2203 = vld [vmem:[%s2183 + $0x4c] sm:$0xf]
        %v2204 = vld [vmem:[%s2183 + $0x50] sm:$0xf]
        %v2205 = vld [vmem:[%s2183 + $0x54] sm:$0xf]
        %v2206 = vld [vmem:[%s2183 + $0x58] sm:$0xf]
        %v2207 = vld [vmem:[%s2183 + $0x5c] sm:$0xf]
        %v2208 = vld [vmem:[%s2183 + $0x60] sm:$0xf]
        %v2209 = vld [vmem:[%s2183 + $0x64] sm:$0xf]
        %v2210 = vld [vmem:[%s2183 + $0x68] sm:$0xf]
        %v2211 = vld [vmem:[%s2183 + $0x6c] sm:$0xf]
        %v2212 = vld [vmem:[%s2183 + $0x70] sm:$0xf]
        %v2213 = vld [vmem:[%s2183 + $0x74] sm:$0xf]
        %v2214 = vld [vmem:[%s2183 + $0x78] sm:$0xf]
        %v2215 = vld [vmem:[%s2183 + $0x7c] sm:$0xf]
        %v2216 = vld [vmem:[%s2183 + $0x80] sm:$0xf]
        %v2217 = vld [vmem:[%s2183 + $0x84] sm:$0xf]
        %v2218 = vld [vmem:[%s2183 + $0x88] sm:$0xf]
        %v2219 = vld [vmem:[%s2183 + $0x8c] sm:$0xf]
        %v2220 = vld [vmem:[%s2183 + $0x90] sm:$0xf]
        %v2221 = vld [vmem:[%s2183 + $0x94] sm:$0xf]
        %v2222 = vld [vmem:[%s2183 + $0x98] sm:$0xf]
        %v2223 = vld [vmem:[%s2183 + $0x9c] sm:$0xf]
        %v2224 = vld [vmem:[%s2183 + $0xa0] sm:$0xf]
        %v2225 = vld [vmem:[%s2183 + $0xa4] sm:$0xf]
        %v2226 = vld [vmem:[%s2183 + $0xa8] sm:$0xf]
        %v2227 = vld [vmem:[%s2183 + $0xac] sm:$0xf]
        %v2228 = vld [vmem:[%s2183 + $0xb0] sm:$0xf]
        %v2229 = vld [vmem:[%s2183 + $0xb4] sm:$0xf]
        %v2230 = vld [vmem:[%s2183 + $0xb8] sm:$0xf]
        %v2231 = vld [vmem:[%s2183 + $0xbc] sm:$0xf]
        %v2280 = vunpack.c.l.b16 %v2184
        %v2281 = vunpack.c.l.b16 %v2185
        %v2282 = vunpack.c.l.b16 %v2186
        %v2283 = vunpack.c.l.b16 %v2187
        %v2284 = vunpack.c.l.b16 %v2188
        %v2285 = vunpack.c.l.b16 %v2189
        %v2286 = vunpack.c.l.b16 %v2190
        %v2287 = vunpack.c.l.b16 %v2191
        %v2288 = vunpack.c.l.b16 %v2192
        %v2289 = vunpack.c.l.b16 %v2193
        %v2290 = vunpack.c.l.b16 %v2194
        %v2291 = vunpack.c.l.b16 %v2195
        %v2292 = vunpack.c.l.b16 %v2196
        %v2293 = vunpack.c.l.b16 %v2197
        %v2294 = vunpack.c.l.b16 %v2198
        %v2295 = vunpack.c.l.b16 %v2199
        %v2296 = vunpack.c.l.b16 %v2200
        %v2297 = vunpack.c.l.b16 %v2201
        %v2298 = vunpack.c.l.b16 %v2202
        %v2299 = vunpack.c.l.b16 %v2203
        %v2300 = vunpack.c.l.b16 %v2204
        %v2301 = vunpack.c.l.b16 %v2205
        %v2302 = vunpack.c.l.b16 %v2206
        %v2303 = vunpack.c.l.b16 %v2207
        %v2304 = vunpack.c.l.b16 %v2208
        %v2305 = vunpack.c.l.b16 %v2209
        %v2306 = vunpack.c.l.b16 %v2210
        %v2307 = vunpack.c.l.b16 %v2211
        %v2308 = vunpack.c.l.b16 %v2212
        %v2309 = vunpack.c.l.b16 %v2213
        %v2310 = vunpack.c.l.b16 %v2214
        %v2311 = vunpack.c.l.b16 %v2215
        %v2312 = vunpack.c.l.b16 %v2216
        %v2313 = vunpack.c.l.b16 %v2217
        %v2314 = vunpack.c.l.b16 %v2218
        %v2315 = vunpack.c.l.b16 %v2219
        %v2316 = vunpack.c.l.b16 %v2220
        %v2317 = vunpack.c.l.b16 %v2221
        %v2318 = vunpack.c.l.b16 %v2222
        %v2319 = vunpack.c.l.b16 %v2223
        %v2320 = vunpack.c.l.b16 %v2224
        %v2321 = vunpack.c.l.b16 %v2225
        %v2322 = vunpack.c.l.b16 %v2226
        %v2323 = vunpack.c.l.b16 %v2227
        %v2324 = vunpack.c.l.b16 %v2228
        %v2325 = vunpack.c.l.b16 %v2229
        %v2326 = vunpack.c.l.b16 %v2230
        %v2327 = vunpack.c.l.b16 %v2231
        %v2328 = vpack.c.b16 %v2281, %v2280
        %v2329 = vpack.c.b16 %v2283, %v2282
        %v2330 = vpack.c.b16 %v2285, %v2284
        %v2331 = vpack.c.b16 %v2287, %v2286
        %v2332 = vpack.c.b16 %v2289, %v2288
        %v2333 = vpack.c.b16 %v2291, %v2290
        %v2334 = vpack.c.b16 %v2293, %v2292
        %v2335 = vpack.c.b16 %v2295, %v2294
        %v2336 = vpack.c.b16 %v2297, %v2296
        %v2337 = vpack.c.b16 %v2299, %v2298
        %v2338 = vpack.c.b16 %v2301, %v2300
        %v2339 = vpack.c.b16 %v2303, %v2302
        %v2340 = vpack.c.b16 %v2305, %v2304
        %v2341 = vpack.c.b16 %v2307, %v2306
        %v2342 = vpack.c.b16 %v2309, %v2308
        %v2343 = vpack.c.b16 %v2311, %v2310
        %v2344 = vpack.c.b16 %v2313, %v2312
        %v2345 = vpack.c.b16 %v2315, %v2314
        %v2346 = vpack.c.b16 %v2317, %v2316
        %v2347 = vpack.c.b16 %v2319, %v2318
        %v2348 = vpack.c.b16 %v2321, %v2320
        %v2349 = vpack.c.b16 %v2323, %v2322
        %v2350 = vpack.c.b16 %v2325, %v2324
        %v2351 = vpack.c.b16 %v2327, %v2326
        %2376 = vmatprep.subr.bf16.mxu0 0
        %2377 = vmatpush1.bf16.msra.mxu0 %v2328
        %2378 = vmatprep.subr.bf16.mxu0 0
        %2379 = vmatpush1.bf16.msra.mxu0 %v2329
        %2380 = vmatprep.subr.bf16.mxu0 0
        %2381 = vmatpush1.bf16.msra.mxu0 %v2330
        %2382 = vmatprep.subr.bf16.mxu0 0
        %2383 = vmatpush1.bf16.msra.mxu0 %v2331
        %2384 = vmatprep.subr.bf16.mxu0 0
        %2385 = vmatpush1.bf16.msra.mxu0 %v2332
        %2386 = vmatprep.subr.bf16.mxu0 0
        %2387 = vmatpush1.bf16.msra.mxu0 %v2333
        %2388 = vmatprep.subr.bf16.mxu0 0
        %2389 = vmatpush1.bf16.msra.mxu0 %v2334
        %2390 = vmatprep.subr.bf16.mxu0 0
        %2391 = vmatpush1.bf16.msra.mxu0 %v2335
        %2392 = vmatprep.subr.bf16.mxu0 0
        %2393 = vmatpush1.bf16.msra.mxu0 %v2336
        %2394 = vmatprep.subr.bf16.mxu0 0
        %2395 = vmatpush1.bf16.msra.mxu0 %v2337
        %2396 = vmatprep.subr.bf16.mxu0 0
        %2397 = vmatpush1.bf16.msra.mxu0 %v2338
        %2398 = vmatprep.subr.bf16.mxu0 0
        %2399 = vmatpush1.bf16.msra.mxu0 %v2339
        %2400 = vmatprep.subr.bf16.mxu0 0
        %2401 = vmatpush1.bf16.msra.mxu0 %v2340
        %2402 = vmatprep.subr.bf16.mxu0 0
        %2403 = vmatpush1.bf16.msra.mxu0 %v2341
        %2404 = vmatprep.subr.bf16.mxu0 0
        %2405 = vmatpush1.bf16.msra.mxu0 %v2342
        %2406 = vmatprep.subr.bf16.mxu0 0
        %2407 = vmatpush1.bf16.msra.mxu0 %v2343
        %2408 = vmatprep.mubr.bf16.mxu0 %v2177
        %2409 = vmatmul.mubr.bf16.gmra.mrb[0].mxu0 %v2173
        %v2410 = vpop.f32.mrb[0].mxu0
        %v2411 = vadd.f32 0.0, %v2410
        %v2412 = vpop.f32.mrb[0].mxu0
        %v2413 = vpop.f32.mrb[0].mxu0
        %v2414 = vpop.f32.mrb[0].mxu0
        %2415 = vdwg.mxu0
        %2416 = vmatprep.subr.bf16.mxu0 0
        %2417 = vmatpush1.bf16.msra.mxu0 %v2344
        %2418 = vmatprep.subr.bf16.mxu0 0
        %2419 = vmatpush1.bf16.msra.mxu0 %v2345
        %2420 = vmatprep.subr.bf16.mxu0 0
        %2421 = vmatpush1.bf16.msra.mxu0 %v2346
        %2422 = vmatprep.subr.bf16.mxu0 0
        %2423 = vmatpush1.bf16.msra.mxu0 %v2347
        %2424 = vmatprep.subr.bf16.mxu0 0
        %2425 = vmatpush1.bf16.msra.mxu0 %v2348
        %2426 = vmatprep.subr.bf16.mxu0 0
        %2427 = vmatpush1.bf16.msra.mxu0 %v2349
        %2428 = vmatprep.subr.bf16.mxu0 0
        %2429 = vmatpush1.bf16.msra.mxu0 %v2350
        %2430 = vmatprep.subr.bf16.mxu0 0
        %2431 = vmatpush1.bf16.msra.mxu0 %v2351
        %2432 = vmatprep.subr.bf16.mxu0 0
        %2433 = vmatpush1.bf16.msra.mxu0 0
        %2434 = vmatprep.subr.bf16.mxu0 0
        %2435 = vmatpush1.bf16.msra.mxu0 0
        %2436 = vmatprep.subr.bf16.mxu0 0
        %2437 = vmatpush1.bf16.msra.mxu0 0
        %2438 = vmatprep.subr.bf16.mxu0 0
        %2439 = vmatpush1.bf16.msra.mxu0 0
        %2440 = vmatprep.subr.bf16.mxu0 0
        %2441 = vmatpush1.bf16.msra.mxu0 0
        %2442 = vmatprep.subr.bf16.mxu0 0
        %2443 = vmatpush1.bf16.msra.mxu0 0
        %2444 = vmatprep.subr.bf16.mxu0 0
        %2445 = vmatpush1.bf16.msra.mxu0 0
        %2446 = vmatprep.subr.bf16.mxu0 0
        %2447 = vmatpush1.bf16.msra.mxu0 0
        %2448 = vmatprep.mubr.bf16.mxu0 0
        %2449 = vmatmul.mubr.bf16.gmra.mrb[0].mxu0 %v2181
        %v2450 = vpop.f32.mrb[0].mxu0
        %v2451 = vadd.f32 %v2411, %v2450
        %v2452 = vpop.f32.mrb[0].mxu0
        %v2453 = vpop.f32.mrb[0].mxu0
        %v2454 = vpop.f32.mrb[0].mxu0
        %2455 = vdwg.mxu0
        %v2456 = vld [vmem:[%s2 + $0x8] sm:$0x1]
        %v2457 = vld [vmem:[%s2 + $0x9] sm:$0x1]
        %v2458 = vlaneseq
        %v2459 = vshrl.u32 %v2458, 7
        %v2460 = vsub.s32 0, %v2459
        %v2461 = vrot.slane %v2456, %v2460
        %v2462 = vmul.f32 %v2451, %v2461
        %v2463 = vlaneseq
        %v2464 = vshrl.u32 %v2463, 7
        %v2465 = vsub.s32 0, %v2464
        %v2466 = vrot.slane %v2457, %v2465
        %v2467 = vadd.f32 %v2462, %v2466
        %v2468 = vmax.f32 %v2467, 0.0
        %v2470 = vcombine.high %v2468, %v2468
        %v2472 = vsel %vm1003, %v2468, -inf
        %v2473 = vrot.slane %v2472, 4
        %v2474 = vmax.f32 %v2472, %v2473
        %v2475 = vrot.slane %v2474, 2
        %v2476 = vmax.f32 %v2474, %v2475
        %v2477 = vrot.slane %v2476, 1
        %v2478 = vmax.f32 %v2476, %v2477
        %v2479 = vsel %vm1003, %v2470, -inf
        %v2480 = vrot.slane %v2479, 4
        %v2481 = vmax.f32 %v2479, %v2480
        %v2482 = vrot.slane %v2481, 2
        %v2483 = vmax.f32 %v2481, %v2482
        %v2484 = vrot.slane %v2483, 1
        %v2485 = vmax.f32 %v2483, %v2484
        %v2488 = vsel %vm987, %v2485, %v2478
        %vm2490 = vcmask 517120
        %2491 = vst.msk [vmem:[%s190] sm:$0x3] %vm2490, %v2488
        %s2492 = sand.u32 %s115, 1
        %s2493 = scalar_lea.sflag [#allocation4], %s2492
        %s2494 = sand.u32 %s115, 1
        %s2495 = smul.addr %s2494, 2
        %s2496 = scalar_lea.vmem [#allocation3], %s2495
        // Predicated region
        $region37: #{tpu_custom_call.1} parent=35 // pred_check
          %p2497 = pneg %p125
        $region38: #{tpu_custom_call.1} parent=35 // pred_check_branch
          %2499 = sbr.rel (%p2497) target = $region40
        $region39: #{tpu_custom_call.1} parent=35 // pred_region
          %s2501 = ssub.s32 32, 32
          %2502 = vsyncadd %s2493, %s2501
          %s2503 = smul.addr %s18, 32
          %s2504 = scalar_lea.hbm %s4, %s2503
          %s2506 = sshll.u32 %s2496, 4
          %s2507 = int_to_ptr.vmem [resolvable:$true] %s2506
          %2509 = dma.vmem_to_hbm [thread:$0]  %s2507, 32, %s2504, %s2493
        $region40: #{tpu_custom_call.1} parent=35 // pred_fallthru
          _
      $region36: #{tpu_custom_call.1} parent=5 // pred_fallthru
        _
      %p2510 = scmp.le.s32.totalorder 2, %s13
      // Predicated region
      $region41: #{tpu_custom_call.1} parent=5 // pred_check
        %p2511 = pneg %p2510
      $region42: #{tpu_custom_call.1} parent=5 // pred_check_branch
        %2513 = sbr.rel (%p2511) target = $region44
      $region43: #{tpu_custom_call.1} parent=5 // pred_region
        %s2514 = ssub.s32 %s13, 2
        // Predicated region
        $region45: #{tpu_custom_call.1} parent=43 // pred_check
          %p2515 = pneg %p131
        $region46: #{tpu_custom_call.1} parent=43 // pred_check_branch
          %2517 = sbr.rel (%p2515) target = $region48
        $region47: #{tpu_custom_call.1} parent=43 // pred_region
          %s2518 = sand.u32 %s116, 1
          %s2519 = scalar_lea.sflag [#allocation4], %s2518
          %s2520 = sand.u32 %s116, 1
          %s2521 = smul.addr %s2520, 2
          %s2522 = scalar_lea.vmem [#allocation3], %s2521
          %2523 = dma.done %s2519, 32
        $region48: #{tpu_custom_call.1} parent=43 // pred_fallthru
          _
      $region44: #{tpu_custom_call.1} parent=5 // pred_fallthru
        _
    $region6: #{tpu_custom_call.1} parent=1 // loop_footer
      %s17 = sadd.s32 1, %s13
    $region7: #{tpu_custom_call.1} parent=1 // loop_footer_branch
      %12 = sbr.rel target = $region3
    $region8: #{tpu_custom_call.1} parent=1 // loop_exit
      _
    %2524 = vsyncpa [#allocation4], 1
    %s2525 = scalar_lea.sflag [#allocation4], 1
    %2526 = vsyncpa %s2525, 1

</llo_original>
